<compile_context>
chip_gen: v7x
topology: tpu7x:2x2x1
jax: 0.10.0
libtpu: 0.0.40
codegen_flags: <defaults>
</compile_context>

<pallas_src>
import math

import jax
import jax.numpy as jnp
from jax.experimental import pallas as pl
from jax.experimental.pallas import tpu as pltpu


def _gelu_tanh(x):
    # tanh-approximate GELU in f32 (tanh goes to the otherwise-idle EUP slot).
    c = math.sqrt(2.0 / math.pi)
    return 0.5 * x * (1.0 + jnp.tanh(c * (x + 0.044715 * x * x * x)))


def _mos_kernel(frames_ref, wssl_ref, bssl_ref, wout_ref, bout_ref, o_ref):
    """One grid step = one tile of Bt utterances.

    frames_ref : (1, T*Bt, F) bf16  time-major framed waveforms for this tile
    wssl_ref   : (F, D)       bf16  synthetic SSL frame-encoder weight
    bssl_ref   : (1, D)       f32   synthetic SSL frame-encoder bias
    wout_ref   : (1, D)       f32   output_layer.weight (row layout)
    bout_ref   : (1, 1)       f32   output_layer.bias (SMEM scalar)
    o_ref      : (1, 1, Bt)   f32   MOS scores for this tile (lane-dense)
    """
    tb, F = frames_ref.shape[1], frames_ref.shape[2]
    D = wssl_ref.shape[1]
    Bt = o_ref.shape[2]
    T = tb // Bt

    x = frames_ref[0]                                        # (T*Bt, F) bf16

    # Synthetic SSL encoder: one big MXU matmul, f32 accumulation.
    feats = jnp.dot(x, wssl_ref[...],
                    preferred_element_type=jnp.float32)      # (T*Bt, D) f32
    feats = _gelu_tanh(feats + bssl_ref[...])

    # torch.mean(x, 1): rows are time-major (t*Bt + b), so the time mean is a
    # sum of T contiguous, aligned (Bt, D) slabs (pure VPU adds).
    acc = feats[0:Bt]
    for t in range(1, T):
        acc = acc + feats[t * Bt:(t + 1) * Bt]
    mean_feat = acc * (1.0 / T)                               # (Bt, D) f32

    # output_layer: Linear(D, 1) as VPU multiply + lane reduce (no MXU).
    scores = jnp.sum(mean_feat * wout_ref[...], axis=-1) + bout_ref[0, 0]

    o_ref[...] = scores.reshape(1, 1, Bt)                     # lane-dense store


def mos_predictor_forward(wav, w_ssl, b_ssl, w_out, b_out, *,
                          frame_len, block_b=128):
    """wav: [B, 1, L] float32.  Returns [B] float32."""
    B = wav.shape[0]
    wav2 = wav.reshape(B, -1)                    # .squeeze(1) -> [B, L]
    L = wav2.shape[1]
    assert L % frame_len == 0
    T = L // frame_len
    F = frame_len
    D = w_ssl.shape[1]

    # Pad the batch to a multiple of the batch tile (lane-dense output rows).
    Bt = block_b
    G = pl.cdiv(B, Bt)
    B_pad = G * Bt
    if B_pad != B:
        wav2 = jnp.pad(wav2, ((0, B_pad - B), (0, 0)))

    # Frame the waveform and lay it out time-major per tile: (G, T*Bt, F).
    frames = (wav2.reshape(G, Bt, T, F)
                  .transpose(0, 2, 1, 3)
                  .reshape(G, T * Bt, F)
                  .astype(jnp.bfloat16))
    w_ssl_b = w_ssl.astype(jnp.bfloat16)
    b_ssl_f = b_ssl.reshape(1, D).astype(jnp.float32)
    w_out_r = w_out.reshape(1, D).astype(jnp.float32)
    b_out_s = b_out.reshape(1, 1).astype(jnp.float32)

    cost = pl.CostEstimate(
        flops=2 * B_pad * T * F * D + 2 * B_pad * D,
        transcendentals=B_pad * T * D,
        bytes_accessed=(B_pad * T * F * 2) + (F * D * 2)
                       + (2 * D + 1) * 4 + B_pad * 4,
    )

    out = pl.pallas_call(
        _mos_kernel,
        out_shape=jax.ShapeDtypeStruct((G, 1, Bt), jnp.float32),
        grid_spec=pltpu.PrefetchScalarGridSpec(
            num_scalar_prefetch=0,
            grid=(G,),
            in_specs=[
                pl.BlockSpec((1, T * Bt, F), lambda g: (g, 0, 0)),   # frames
                pl.BlockSpec((F, D), lambda g: (0, 0)),              # W_ssl
                pl.BlockSpec((1, D), lambda g: (0, 0)),              # b_ssl
                pl.BlockSpec((1, D), lambda g: (0, 0)),              # W_out
                pl.BlockSpec(memory_space=pltpu.MemorySpace.SMEM),   # b_out
            ],
            out_specs=pl.BlockSpec((1, 1, Bt), lambda g: (g, 0, 0)),
        ),
        compiler_params=pltpu.CompilerParams(
            dimension_semantics=("parallel",)),
        cost_estimate=cost,
    )(frames, w_ssl_b, b_ssl_f, w_out_r, b_out_s)

    return out.reshape(B_pad)[:B]                # .squeeze(1) -> [B]


def _reference_forward(wav, w_ssl, b_ssl, w_out, b_out, *, frame_len):
    """Plain-JAX reference of the same synthetic forward pass (bf16 matmul,
    f32 everything else — mirrors the kernel numerics)."""
    B = wav.shape[0]
    wav2 = wav.reshape(B, -1)
    T = wav2.shape[1] // frame_len
    frames = wav2.reshape(B, T, frame_len).astype(jnp.bfloat16)
    feats = jnp.einsum("btf,fd->btd", frames, w_ssl.astype(jnp.bfloat16),
                       preferred_element_type=jnp.float32)
    feats = _gelu_tanh(feats + b_ssl.reshape(1, 1, -1).astype(jnp.float32))
    x = jnp.mean(feats, axis=1)                               # [B, D]
    x = x @ w_out.reshape(-1, 1) + b_out.reshape(1, 1)        # [B, 1]
    return x.reshape(B)


if __name__ == "__main__":
    # Small shapes: batch=2, L = T*F with T=8 frames of F=32 samples,
    # ssl_out_dim D=32.
    B, T, F, D = 2, 8, 32, 32
    L = T * F

    key = jax.random.PRNGKey(0)
    k_wav, k_wssl, k_bssl, k_wout, k_bout = jax.random.split(key, 5)

    wav = jax.random.normal(k_wav, (B, 1, L), dtype=jnp.float32)

    # Deterministic synthetic parameters.
    w_ssl = jax.random.normal(k_wssl, (F, D), jnp.float32) * (1.0 / math.sqrt(F))
    b_ssl = jax.random.normal(k_bssl, (D,), jnp.float32) * 0.02
    # nn.Linear(ssl_features, 1): weight is [1, D] in torch layout.
    w_out = jax.random.normal(k_wout, (1, D), jnp.float32) * (1.0 / math.sqrt(D))
    b_out = jax.random.normal(k_bout, (1,), jnp.float32) * 0.02

    y = mos_predictor_forward(wav, w_ssl, b_ssl, w_out, b_out, frame_len=F)
    y = jax.block_until_ready(y)

    y_ref = _reference_forward(wav, w_ssl, b_ssl, w_out, b_out, frame_len=F)
    assert y.shape == (B,)
    assert jnp.allclose(y, y_ref, atol=1e-3, rtol=1e-3), (y, y_ref)

    print("KERNEL_OK")
</pallas_src>

<mosaic_0001>
module attributes {stable_mosaic.version = 11 : i64} {
  func.func @_mos_kernel(%arg0: i32, %arg1: memref<1x1024x32xbf16, #tpu.memory_space<vmem>>, %arg2: memref<32x32xbf16, #tpu.memory_space<vmem>>, %arg3: memref<1x32xf32, #tpu.memory_space<vmem>>, %arg4: memref<1x32xf32, #tpu.memory_space<vmem>>, %arg5: memref<1x1xf32, #tpu.memory_space<smem>>, %arg6: memref<1x1x128xf32, #tpu.memory_space<vmem>>) attributes {dimension_semantics = [#tpu.dimension_semantics<parallel>], iteration_bounds = array<i64: 1>, scalar_prefetch = 0 : i64, scratch_operands = 0 : i64, tpu.core_type = #tpu.core_type<tc>, window_params = [{transform_indices = @transform_0, window_bounds = array<i64: 1, 1024, 32>}, {pipeline_mode = #tpu.pipeline_mode<synchronous>, transform_indices = @transform_1, window_bounds = array<i64: 32, 32>}, {pipeline_mode = #tpu.pipeline_mode<synchronous>, transform_indices = @transform_2, window_bounds = array<i64: 1, 32>}, {pipeline_mode = #tpu.pipeline_mode<synchronous>, transform_indices = @transform_3, window_bounds = array<i64: 1, 32>}, {transform_indices = @transform_4, window_bounds = array<i64: 1, 1>}, {transform_indices = @transform_5, window_bounds = array<i64: 1, 1, 128>}]} {
    %c0 = arith.constant 0 : index
    %c0_0 = arith.constant 0 : index
    %c0_1 = arith.constant 0 : index
    %0 = vector.load %arg1[%c0, %c0_0, %c0_1] : memref<1x1024x32xbf16, #tpu.memory_space<vmem>>, vector<1x1024x32xbf16>
    %1 = vector.shape_cast %0 : vector<1x1024x32xbf16> to vector<1024x32xbf16>
    %c0_2 = arith.constant 0 : index
    %c0_3 = arith.constant 0 : index
    %2 = vector.load %arg2[%c0_2, %c0_3] : memref<32x32xbf16, #tpu.memory_space<vmem>>, vector<32x32xbf16>
    %cst = arith.constant dense<0.000000e+00> : vector<1024x32xf32>
    %3 = tpu.matmul %1, %2, %cst {dimension_numbers = #tpu.dot_dimension_numbers<[1], [0], [0], [1], [0, 0, 1, 1], [], []>} : vector<1024x32xbf16>, vector<32x32xbf16>, vector<1024x32xf32> -> vector<1024x32xf32>
    %c0_4 = arith.constant 0 : index
    %c0_5 = arith.constant 0 : index
    %4 = vector.load %arg3[%c0_4, %c0_5] : memref<1x32xf32, #tpu.memory_space<vmem>>, vector<1x32xf32>
    %5 = vector.broadcast %4 : vector<1x32xf32> to vector<1024x32xf32>
    %6 = arith.addf %3, %5 : vector<1024x32xf32>
    %cst_6 = arith.constant 5.000000e-01 : f32
    %7 = vector.broadcast %cst_6 : f32 to vector<1024x32xf32>
    %8 = arith.mulf %7, %6 : vector<1024x32xf32>
    %cst_7 = arith.constant 4.471500e-02 : f32
    %9 = vector.broadcast %cst_7 : f32 to vector<1024x32xf32>
    %10 = arith.mulf %9, %6 : vector<1024x32xf32>
    %11 = arith.mulf %10, %6 : vector<1024x32xf32>
    %12 = arith.mulf %11, %6 : vector<1024x32xf32>
    %13 = arith.addf %6, %12 : vector<1024x32xf32>
    %cst_8 = arith.constant 0.797884583 : f32
    %14 = vector.broadcast %cst_8 : f32 to vector<1024x32xf32>
    %15 = arith.mulf %14, %13 : vector<1024x32xf32>
    %16 = math.tanh %15 : vector<1024x32xf32>
    %cst_9 = arith.constant 1.000000e+00 : f32
    %17 = vector.broadcast %cst_9 : f32 to vector<1024x32xf32>
    %18 = arith.addf %17, %16 : vector<1024x32xf32>
    %19 = arith.mulf %8, %18 : vector<1024x32xf32>
    %20 = vector.extract_strided_slice %19 {offsets = [0, 0], sizes = [128, 32], strides = [1, 1]} : vector<1024x32xf32> to vector<128x32xf32>
    %21 = vector.extract_strided_slice %19 {offsets = [128, 0], sizes = [128, 32], strides = [1, 1]} : vector<1024x32xf32> to vector<128x32xf32>
    %22 = arith.addf %20, %21 : vector<128x32xf32>
    %23 = vector.extract_strided_slice %19 {offsets = [256, 0], sizes = [128, 32], strides = [1, 1]} : vector<1024x32xf32> to vector<128x32xf32>
    %24 = arith.addf %22, %23 : vector<128x32xf32>
    %25 = vector.extract_strided_slice %19 {offsets = [384, 0], sizes = [128, 32], strides = [1, 1]} : vector<1024x32xf32> to vector<128x32xf32>
    %26 = arith.addf %24, %25 : vector<128x32xf32>
    %27 = vector.extract_strided_slice %19 {offsets = [512, 0], sizes = [128, 32], strides = [1, 1]} : vector<1024x32xf32> to vector<128x32xf32>
    %28 = arith.addf %26, %27 : vector<128x32xf32>
    %29 = vector.extract_strided_slice %19 {offsets = [640, 0], sizes = [128, 32], strides = [1, 1]} : vector<1024x32xf32> to vector<128x32xf32>
    %30 = arith.addf %28, %29 : vector<128x32xf32>
    %31 = vector.extract_strided_slice %19 {offsets = [768, 0], sizes = [128, 32], strides = [1, 1]} : vector<1024x32xf32> to vector<128x32xf32>
    %32 = arith.addf %30, %31 : vector<128x32xf32>
    %33 = vector.extract_strided_slice %19 {offsets = [896, 0], sizes = [128, 32], strides = [1, 1]} : vector<1024x32xf32> to vector<128x32xf32>
    %34 = arith.addf %32, %33 : vector<128x32xf32>
    %cst_10 = arith.constant 1.250000e-01 : f32
    %35 = vector.broadcast %cst_10 : f32 to vector<128x32xf32>
    %36 = arith.mulf %34, %35 : vector<128x32xf32>
    %c0_11 = arith.constant 0 : index
    %c0_12 = arith.constant 0 : index
    %37 = vector.load %arg4[%c0_11, %c0_12] : memref<1x32xf32, #tpu.memory_space<vmem>>, vector<1x32xf32>
    %38 = vector.broadcast %37 : vector<1x32xf32> to vector<128x32xf32>
    %39 = arith.mulf %36, %38 : vector<128x32xf32>
    %cst_13 = arith.constant dense<0.000000e+00> : vector<128xf32>
    %40 = vector.multi_reduction <add>, %39, %cst_13 [1] : vector<128x32xf32> to vector<128xf32>
    %c0_14 = arith.constant 0 : index
    %c0_15 = arith.constant 0 : index
    %41 = memref.load %arg5[%c0_14, %c0_15] : memref<1x1xf32, #tpu.memory_space<smem>>
    %42 = vector.broadcast %41 : f32 to vector<128xf32>
    %43 = arith.addf %40, %42 : vector<128xf32>
    %44 = vector.shape_cast %43 : vector<128xf32> to vector<1x1x128xf32>
    %c0_16 = arith.constant 0 : index
    %c0_17 = arith.constant 0 : index
    %c0_18 = arith.constant 0 : index
    %45 = vector.load %arg6[%c0_16, %c0_17, %c0_18] : memref<1x1x128xf32, #tpu.memory_space<vmem>>, vector<1x1x128xf32>
    tpu.vector_store %arg6[%c0_16, %c0_17, %c0_18], %44 {strides = array<i32>} : memref<1x1x128xf32, #tpu.memory_space<vmem>>, vector<1x1x128xf32>,
    return
  }
  func.func @transform_0(%arg0: i32) -> (i32, i32, i32) {
    %c0_i32 = arith.constant 0 : i32
    %c0_i32_0 = arith.constant 0 : i32
    %c0_i32_1 = arith.constant 0 : i32
    return %arg0, %c0_i32, %c0_i32_0 : i32, i32, i32
  }
  func.func @transform_1(%arg0: i32) -> (i32, i32) {
    %c0_i32 = arith.constant 0 : i32
    %c0_i32_0 = arith.constant 0 : i32
    %c0_i32_1 = arith.constant 0 : i32
    return %c0_i32, %c0_i32_0 : i32, i32
  }
  func.func @transform_2(%arg0: i32) -> (i32, i32) {
    %c0_i32 = arith.constant 0 : i32
    %c0_i32_0 = arith.constant 0 : i32
    %c0_i32_1 = arith.constant 0 : i32
    return %c0_i32, %c0_i32_0 : i32, i32
  }
  func.func @transform_3(%arg0: i32) -> (i32, i32) {
    %c0_i32 = arith.constant 0 : i32
    %c0_i32_0 = arith.constant 0 : i32
    %c0_i32_1 = arith.constant 0 : i32
    return %c0_i32, %c0_i32_0 : i32, i32
  }
  func.func @transform_4(%arg0: i32) -> (i32, i32) {
    %c0_i32 = arith.constant 0 : i32
    %c0_i32_0 = arith.constant 0 : i32
    %c0_i32_1 = arith.constant 0 : i32
    return %c0_i32, %c0_i32_0 : i32, i32
  }
  func.func @transform_5(%arg0: i32) -> (i32, i32, i32) {
    %c0_i32 = arith.constant 0 : i32
    %c0_i32_0 = arith.constant 0 : i32
    %c0_i32_1 = arith.constant 0 : i32
    return %arg0, %c0_i32, %c0_i32_0 : i32, i32, i32
  }
}

</mosaic_0001>

<llo_original>
// kernel: tpu_custom_call.1
$region0: #{tpu_custom_call.1}
  #allocation0 [shape = 'u32[]', space=smem, size = 0x4, offset = 0x4, fixed_abs, tag = 'smem constant byte address 0x4 - core index']
  #allocation1 [shape = 'u32[144,128]{1,0:T(1,128)}', space=vmem, size = 0x12000, scoped, tag = 'internal scratch']
  #allocation2 [shape = 'f32[1,1]{1,0:T(1,128)S(6)}', space=smem, size = 0x200, scoped, tag = 'scoped memory for tpu_custom_call.1']
  %s0 = inlined_call_operand.vmem [shape: bf16[1,1024,32], index: 0, kind: input, shape index: {}]
  %s1 = inlined_call_operand.vmem [shape: bf16[32,32], index: 1, kind: input, shape index: {}]
  %s2 = inlined_call_operand.vmem [shape: f32[1,32], index: 2, kind: input, shape index: {}]
  %s3 = inlined_call_operand.vmem [shape: f32[1,32], index: 3, kind: input, shape index: {}]
  %s4 = inlined_call_operand.<no memory space> [shape: f32[1,1], index: 4, kind: input, shape index: {}]
  %s5 = inlined_call_operand.hbm [shape: f32[1,1,128], index: 5, kind: output, shape index: {}]
  %s6 = sld [smem:[#allocation0]]
  $region30: #{tpu_custom_call.1} parent=0
    _
  %s8 = ssub.s32 1, %s6
  %s9 = scalar_select 0, %s8, %s6
  %10 = sst [smem:[#allocation2]] %s4
  $region1: #{tpu_custom_call.1} parent=0
    #allocation3 [shape = 'u8[512]{0}', space=vmem, size = 0x400, scoped, tag = 'output window, operand 0, single buffered']
    #allocation4 [shape = 's32[1]{0}', space=sflag, size = 0x4, scoped, tag = 'scoped memory for tpu_custom_call.1']
    %11 = vsyncpa [#allocation4], 0
    // Predicated region
    $region2: #{tpu_custom_call.1} parent=1 // pred_check
      _
    $region3: #{tpu_custom_call.1} parent=1 // pred_check_branch
      %13 = sbr.rel (0) target = $region5
    $region4: #{tpu_custom_call.1} parent=1 // pred_region
      _
    $region5: #{tpu_custom_call.1} parent=1 // pred_fallthru
      _
    // Predicated region
    $region6: #{tpu_custom_call.1} parent=1 // pred_check
      _
    $region7: #{tpu_custom_call.1} parent=1 // pred_check_branch
      %15 = sbr.rel (0) target = $region9
    $region8: #{tpu_custom_call.1} parent=1 // pred_region
      _
    $region9: #{tpu_custom_call.1} parent=1 // pred_fallthru
      _
    // Predicated region
    $region10: #{tpu_custom_call.1} parent=1 // pred_check
      _
    $region11: #{tpu_custom_call.1} parent=1 // pred_check_branch
      %17 = sbr.rel (0) target = $region13
    $region12: #{tpu_custom_call.1} parent=1 // pred_region
      _
    $region13: #{tpu_custom_call.1} parent=1 // pred_fallthru
      _
    // Predicated region
    $region14: #{tpu_custom_call.1} parent=1 // pred_check
      _
    $region15: #{tpu_custom_call.1} parent=1 // pred_check_branch
      %19 = sbr.rel (0) target = $region17
    $region16: #{tpu_custom_call.1} parent=1 // pred_region
      _
    $region17: #{tpu_custom_call.1} parent=1 // pred_fallthru
      _
    // Predicated region
    $region18: #{tpu_custom_call.1} parent=1 // pred_check
      _
    $region19: #{tpu_custom_call.1} parent=1 // pred_check_branch
      %21 = sbr.rel (0) target = $region21
    $region20: #{tpu_custom_call.1} parent=1 // pred_region
      _
    $region21: #{tpu_custom_call.1} parent=1 // pred_fallthru
      _
    %v23 = vld [vmem:[%s0] sm:$0xf]
    %v24 = vld [vmem:[%s0 + $0x4] sm:$0xf]
    %v25 = vld [vmem:[%s0 + $0x8] sm:$0xf]
    %v26 = vld [vmem:[%s0 + $0xc] sm:$0xf]
    %v27 = vld [vmem:[%s0 + $0x10] sm:$0xf]
    %v28 = vld [vmem:[%s0 + $0x14] sm:$0xf]
    %v29 = vld [vmem:[%s0 + $0x18] sm:$0xf]
    %v30 = vld [vmem:[%s0 + $0x1c] sm:$0xf]
    %v31 = vld [vmem:[%s0 + $0x20] sm:$0xf]
    %v32 = vld [vmem:[%s0 + $0x24] sm:$0xf]
    %v33 = vld [vmem:[%s0 + $0x28] sm:$0xf]
    %v34 = vld [vmem:[%s0 + $0x2c] sm:$0xf]
    %v35 = vld [vmem:[%s0 + $0x30] sm:$0xf]
    %v36 = vld [vmem:[%s0 + $0x34] sm:$0xf]
    %v37 = vld [vmem:[%s0 + $0x38] sm:$0xf]
    %v38 = vld [vmem:[%s0 + $0x3c] sm:$0xf]
    %v39 = vld [vmem:[%s0 + $0x40] sm:$0xf]
    %v40 = vld [vmem:[%s0 + $0x44] sm:$0xf]
    %v41 = vld [vmem:[%s0 + $0x48] sm:$0xf]
    %v42 = vld [vmem:[%s0 + $0x4c] sm:$0xf]
    %v43 = vld [vmem:[%s0 + $0x50] sm:$0xf]
    %v44 = vld [vmem:[%s0 + $0x54] sm:$0xf]
    %v45 = vld [vmem:[%s0 + $0x58] sm:$0xf]
    %v46 = vld [vmem:[%s0 + $0x5c] sm:$0xf]
    %v47 = vld [vmem:[%s0 + $0x60] sm:$0xf]
    %v48 = vld [vmem:[%s0 + $0x64] sm:$0xf]
    %v49 = vld [vmem:[%s0 + $0x68] sm:$0xf]
    %v50 = vld [vmem:[%s0 + $0x6c] sm:$0xf]
    %v51 = vld [vmem:[%s0 + $0x70] sm:$0xf]
    %v52 = vld [vmem:[%s0 + $0x74] sm:$0xf]
    %v53 = vld [vmem:[%s0 + $0x78] sm:$0xf]
    %v54 = vld [vmem:[%s0 + $0x7c] sm:$0xf]
    %v55 = vld [vmem:[%s0 + $0x80] sm:$0xf]
    %v56 = vld [vmem:[%s0 + $0x84] sm:$0xf]
    %v57 = vld [vmem:[%s0 + $0x88] sm:$0xf]
    %v58 = vld [vmem:[%s0 + $0x8c] sm:$0xf]
    %v59 = vld [vmem:[%s0 + $0x90] sm:$0xf]
    %v60 = vld [vmem:[%s0 + $0x94] sm:$0xf]
    %v61 = vld [vmem:[%s0 + $0x98] sm:$0xf]
    %v62 = vld [vmem:[%s0 + $0x9c] sm:$0xf]
    %v63 = vld [vmem:[%s0 + $0xa0] sm:$0xf]
    %v64 = vld [vmem:[%s0 + $0xa4] sm:$0xf]
    %v65 = vld [vmem:[%s0 + $0xa8] sm:$0xf]
    %v66 = vld [vmem:[%s0 + $0xac] sm:$0xf]
    %v67 = vld [vmem:[%s0 + $0xb0] sm:$0xf]
    %v68 = vld [vmem:[%s0 + $0xb4] sm:$0xf]
    %v69 = vld [vmem:[%s0 + $0xb8] sm:$0xf]
    %v70 = vld [vmem:[%s0 + $0xbc] sm:$0xf]
    %v71 = vld [vmem:[%s0 + $0xc0] sm:$0xf]
    %v72 = vld [vmem:[%s0 + $0xc4] sm:$0xf]
    %v73 = vld [vmem:[%s0 + $0xc8] sm:$0xf]
    %v74 = vld [vmem:[%s0 + $0xcc] sm:$0xf]
    %v75 = vld [vmem:[%s0 + $0xd0] sm:$0xf]
    %v76 = vld [vmem:[%s0 + $0xd4] sm:$0xf]
    %v77 = vld [vmem:[%s0 + $0xd8] sm:$0xf]
    %v78 = vld [vmem:[%s0 + $0xdc] sm:$0xf]
    %v79 = vld [vmem:[%s0 + $0xe0] sm:$0xf]
    %v80 = vld [vmem:[%s0 + $0xe4] sm:$0xf]
    %v81 = vld [vmem:[%s0 + $0xe8] sm:$0xf]
    %v82 = vld [vmem:[%s0 + $0xec] sm:$0xf]
    %v83 = vld [vmem:[%s0 + $0xf0] sm:$0xf]
    %v84 = vld [vmem:[%s0 + $0xf4] sm:$0xf]
    %v85 = vld [vmem:[%s0 + $0xf8] sm:$0xf]
    %v86 = vld [vmem:[%s0 + $0xfc] sm:$0xf]
    %v87 = vld [vmem:[%s0 + $0x100] sm:$0xf]
    %v88 = vld [vmem:[%s0 + $0x104] sm:$0xf]
    %v89 = vld [vmem:[%s0 + $0x108] sm:$0xf]
    %v90 = vld [vmem:[%s0 + $0x10c] sm:$0xf]
    %v91 = vld [vmem:[%s0 + $0x110] sm:$0xf]
    %v92 = vld [vmem:[%s0 + $0x114] sm:$0xf]
    %v93 = vld [vmem:[%s0 + $0x118] sm:$0xf]
    %v94 = vld [vmem:[%s0 + $0x11c] sm:$0xf]
    %v95 = vld [vmem:[%s0 + $0x120] sm:$0xf]
    %v96 = vld [vmem:[%s0 + $0x124] sm:$0xf]
    %v97 = vld [vmem:[%s0 + $0x128] sm:$0xf]
    %v98 = vld [vmem:[%s0 + $0x12c] sm:$0xf]
    %v99 = vld [vmem:[%s0 + $0x130] sm:$0xf]
    %v100 = vld [vmem:[%s0 + $0x134] sm:$0xf]
    %v101 = vld [vmem:[%s0 + $0x138] sm:$0xf]
    %v102 = vld [vmem:[%s0 + $0x13c] sm:$0xf]
    %v103 = vld [vmem:[%s0 + $0x140] sm:$0xf]
    %v104 = vld [vmem:[%s0 + $0x144] sm:$0xf]
    %v105 = vld [vmem:[%s0 + $0x148] sm:$0xf]
    %v106 = vld [vmem:[%s0 + $0x14c] sm:$0xf]
    %v107 = vld [vmem:[%s0 + $0x150] sm:$0xf]
    %v108 = vld [vmem:[%s0 + $0x154] sm:$0xf]
    %v109 = vld [vmem:[%s0 + $0x158] sm:$0xf]
    %v110 = vld [vmem:[%s0 + $0x15c] sm:$0xf]
    %v111 = vld [vmem:[%s0 + $0x160] sm:$0xf]
    %v112 = vld [vmem:[%s0 + $0x164] sm:$0xf]
    %v113 = vld [vmem:[%s0 + $0x168] sm:$0xf]
    %v114 = vld [vmem:[%s0 + $0x16c] sm:$0xf]
    %v115 = vld [vmem:[%s0 + $0x170] sm:$0xf]
    %v116 = vld [vmem:[%s0 + $0x174] sm:$0xf]
    %v117 = vld [vmem:[%s0 + $0x178] sm:$0xf]
    %v118 = vld [vmem:[%s0 + $0x17c] sm:$0xf]
    %v119 = vld [vmem:[%s0 + $0x180] sm:$0xf]
    %v120 = vld [vmem:[%s0 + $0x184] sm:$0xf]
    %v121 = vld [vmem:[%s0 + $0x188] sm:$0xf]
    %v122 = vld [vmem:[%s0 + $0x18c] sm:$0xf]
    %v123 = vld [vmem:[%s0 + $0x190] sm:$0xf]
    %v124 = vld [vmem:[%s0 + $0x194] sm:$0xf]
    %v125 = vld [vmem:[%s0 + $0x198] sm:$0xf]
    %v126 = vld [vmem:[%s0 + $0x19c] sm:$0xf]
    %v127 = vld [vmem:[%s0 + $0x1a0] sm:$0xf]
    %v128 = vld [vmem:[%s0 + $0x1a4] sm:$0xf]
    %v129 = vld [vmem:[%s0 + $0x1a8] sm:$0xf]
    %v130 = vld [vmem:[%s0 + $0x1ac] sm:$0xf]
    %v131 = vld [vmem:[%s0 + $0x1b0] sm:$0xf]
    %v132 = vld [vmem:[%s0 + $0x1b4] sm:$0xf]
    %v133 = vld [vmem:[%s0 + $0x1b8] sm:$0xf]
    %v134 = vld [vmem:[%s0 + $0x1bc] sm:$0xf]
    %v135 = vld [vmem:[%s0 + $0x1c0] sm:$0xf]
    %v136 = vld [vmem:[%s0 + $0x1c4] sm:$0xf]
    %v137 = vld [vmem:[%s0 + $0x1c8] sm:$0xf]
    %v138 = vld [vmem:[%s0 + $0x1cc] sm:$0xf]
    %v139 = vld [vmem:[%s0 + $0x1d0] sm:$0xf]
    %v140 = vld [vmem:[%s0 + $0x1d4] sm:$0xf]
    %v141 = vld [vmem:[%s0 + $0x1d8] sm:$0xf]
    %v142 = vld [vmem:[%s0 + $0x1dc] sm:$0xf]
    %v143 = vld [vmem:[%s0 + $0x1e0] sm:$0xf]
    %v144 = vld [vmem:[%s0 + $0x1e4] sm:$0xf]
    %v145 = vld [vmem:[%s0 + $0x1e8] sm:$0xf]
    %v146 = vld [vmem:[%s0 + $0x1ec] sm:$0xf]
    %v147 = vld [vmem:[%s0 + $0x1f0] sm:$0xf]
    %v148 = vld [vmem:[%s0 + $0x1f4] sm:$0xf]
    %v149 = vld [vmem:[%s0 + $0x1f8] sm:$0xf]
    %v150 = vld [vmem:[%s0 + $0x1fc] sm:$0xf]
    %v151 = vld [vmem:[%s1] sm:$0xf]
    %v152 = vld [vmem:[%s1 + $0x4] sm:$0xf]
    %v153 = vld [vmem:[%s1 + $0x8] sm:$0xf]
    %v154 = vld [vmem:[%s1 + $0xc] sm:$0xf]
    %v155 = vld [vmem:[%s2] sm:$0x1]
    %v157 = vlaneseq
    %v158 = vshrl.u32 %v157, 7
    %v159 = vsub.s32 0, %v158
    %v160 = vrot.slane %v155, %v159
    %v290 = vunpack.c.l.b16 %v23
    %v291 = vunpack.c.l.b16 %v24
    %v292 = vunpack.c.l.b16 %v25
    %v293 = vunpack.c.l.b16 %v26
    %v294 = vunpack.c.l.b16 %v27
    %v295 = vunpack.c.l.b16 %v28
    %v296 = vunpack.c.l.b16 %v29
    %v297 = vunpack.c.l.b16 %v30
    %v298 = vunpack.c.l.b16 %v31
    %v299 = vunpack.c.l.b16 %v32
    %v300 = vunpack.c.l.b16 %v33
    %v301 = vunpack.c.l.b16 %v34
    %v302 = vunpack.c.l.b16 %v35
    %v303 = vunpack.c.l.b16 %v36
    %v304 = vunpack.c.l.b16 %v37
    %v305 = vunpack.c.l.b16 %v38
    %v306 = vunpack.c.l.b16 %v39
    %v307 = vunpack.c.l.b16 %v40
    %v308 = vunpack.c.l.b16 %v41
    %v309 = vunpack.c.l.b16 %v42
    %v310 = vunpack.c.l.b16 %v43
    %v311 = vunpack.c.l.b16 %v44
    %v312 = vunpack.c.l.b16 %v45
    %v313 = vunpack.c.l.b16 %v46
    %v314 = vunpack.c.l.b16 %v47
    %v315 = vunpack.c.l.b16 %v48
    %v316 = vunpack.c.l.b16 %v49
    %v317 = vunpack.c.l.b16 %v50
    %v318 = vunpack.c.l.b16 %v51
    %v319 = vunpack.c.l.b16 %v52
    %v320 = vunpack.c.l.b16 %v53
    %v321 = vunpack.c.l.b16 %v54
    %v322 = vunpack.c.l.b16 %v55
    %v323 = vunpack.c.l.b16 %v56
    %v324 = vunpack.c.l.b16 %v57
    %v325 = vunpack.c.l.b16 %v58
    %v326 = vunpack.c.l.b16 %v59
    %v327 = vunpack.c.l.b16 %v60
    %v328 = vunpack.c.l.b16 %v61
    %v329 = vunpack.c.l.b16 %v62
    %v330 = vunpack.c.l.b16 %v63
    %v331 = vunpack.c.l.b16 %v64
    %v332 = vunpack.c.l.b16 %v65
    %v333 = vunpack.c.l.b16 %v66
    %v334 = vunpack.c.l.b16 %v67
    %v335 = vunpack.c.l.b16 %v68
    %v336 = vunpack.c.l.b16 %v69
    %v337 = vunpack.c.l.b16 %v70
    %v338 = vunpack.c.l.b16 %v71
    %v339 = vunpack.c.l.b16 %v72
    %v340 = vunpack.c.l.b16 %v73
    %v341 = vunpack.c.l.b16 %v74
    %v342 = vunpack.c.l.b16 %v75
    %v343 = vunpack.c.l.b16 %v76
    %v344 = vunpack.c.l.b16 %v77
    %v345 = vunpack.c.l.b16 %v78
    %v346 = vunpack.c.l.b16 %v79
    %v347 = vunpack.c.l.b16 %v80
    %v348 = vunpack.c.l.b16 %v81
    %v349 = vunpack.c.l.b16 %v82
    %v350 = vunpack.c.l.b16 %v83
    %v351 = vunpack.c.l.b16 %v84
    %v352 = vunpack.c.l.b16 %v85
    %v353 = vunpack.c.l.b16 %v86
    %v354 = vunpack.c.l.b16 %v87
    %v355 = vunpack.c.l.b16 %v88
    %v356 = vunpack.c.l.b16 %v89
    %v357 = vunpack.c.l.b16 %v90
    %v358 = vunpack.c.l.b16 %v91
    %v359 = vunpack.c.l.b16 %v92
    %v360 = vunpack.c.l.b16 %v93
    %v361 = vunpack.c.l.b16 %v94
    %v362 = vunpack.c.l.b16 %v95
    %v363 = vunpack.c.l.b16 %v96
    %v364 = vunpack.c.l.b16 %v97
    %v365 = vunpack.c.l.b16 %v98
    %v366 = vunpack.c.l.b16 %v99
    %v367 = vunpack.c.l.b16 %v100
    %v368 = vunpack.c.l.b16 %v101
    %v369 = vunpack.c.l.b16 %v102
    %v370 = vunpack.c.l.b16 %v103
    %v371 = vunpack.c.l.b16 %v104
    %v372 = vunpack.c.l.b16 %v105
    %v373 = vunpack.c.l.b16 %v106
    %v374 = vunpack.c.l.b16 %v107
    %v375 = vunpack.c.l.b16 %v108
    %v376 = vunpack.c.l.b16 %v109
    %v377 = vunpack.c.l.b16 %v110
    %v378 = vunpack.c.l.b16 %v111
    %v379 = vunpack.c.l.b16 %v112
    %v380 = vunpack.c.l.b16 %v113
    %v381 = vunpack.c.l.b16 %v114
    %v382 = vunpack.c.l.b16 %v115
    %v383 = vunpack.c.l.b16 %v116
    %v384 = vunpack.c.l.b16 %v117
    %v385 = vunpack.c.l.b16 %v118
    %v386 = vunpack.c.l.b16 %v119
    %v387 = vunpack.c.l.b16 %v120
    %v388 = vunpack.c.l.b16 %v121
    %v389 = vunpack.c.l.b16 %v122
    %v390 = vunpack.c.l.b16 %v123
    %v391 = vunpack.c.l.b16 %v124
    %v392 = vunpack.c.l.b16 %v125
    %v393 = vunpack.c.l.b16 %v126
    %v394 = vunpack.c.l.b16 %v127
    %v395 = vunpack.c.l.b16 %v128
    %v396 = vunpack.c.l.b16 %v129
    %v397 = vunpack.c.l.b16 %v130
    %v398 = vunpack.c.l.b16 %v131
    %v399 = vunpack.c.l.b16 %v132
    %v400 = vunpack.c.l.b16 %v133
    %v401 = vunpack.c.l.b16 %v134
    %v402 = vunpack.c.l.b16 %v135
    %v403 = vunpack.c.l.b16 %v136
    %v404 = vunpack.c.l.b16 %v137
    %v405 = vunpack.c.l.b16 %v138
    %v406 = vunpack.c.l.b16 %v139
    %v407 = vunpack.c.l.b16 %v140
    %v408 = vunpack.c.l.b16 %v141
    %v409 = vunpack.c.l.b16 %v142
    %v410 = vunpack.c.l.b16 %v143
    %v411 = vunpack.c.l.b16 %v144
    %v412 = vunpack.c.l.b16 %v145
    %v413 = vunpack.c.l.b16 %v146
    %v414 = vunpack.c.l.b16 %v147
    %v415 = vunpack.c.l.b16 %v148
    %v416 = vunpack.c.l.b16 %v149
    %v417 = vunpack.c.l.b16 %v150
    %v418 = vpack.c.b16 %v291, %v290
    %v419 = vpack.c.b16 %v293, %v292
    %v420 = vpack.c.b16 %v295, %v294
    %v421 = vpack.c.b16 %v297, %v296
    %v422 = vpack.c.b16 %v299, %v298
    %v423 = vpack.c.b16 %v301, %v300
    %v424 = vpack.c.b16 %v303, %v302
    %v425 = vpack.c.b16 %v305, %v304
    %v426 = vpack.c.b16 %v307, %v306
    %v427 = vpack.c.b16 %v309, %v308
    %v428 = vpack.c.b16 %v311, %v310
    %v429 = vpack.c.b16 %v313, %v312
    %v430 = vpack.c.b16 %v315, %v314
    %v431 = vpack.c.b16 %v317, %v316
    %v432 = vpack.c.b16 %v319, %v318
    %v433 = vpack.c.b16 %v321, %v320
    %v434 = vpack.c.b16 %v323, %v322
    %v435 = vpack.c.b16 %v325, %v324
    %v436 = vpack.c.b16 %v327, %v326
    %v437 = vpack.c.b16 %v329, %v328
    %v438 = vpack.c.b16 %v331, %v330
    %v439 = vpack.c.b16 %v333, %v332
    %v440 = vpack.c.b16 %v335, %v334
    %v441 = vpack.c.b16 %v337, %v336
    %v442 = vpack.c.b16 %v339, %v338
    %v443 = vpack.c.b16 %v341, %v340
    %v444 = vpack.c.b16 %v343, %v342
    %v445 = vpack.c.b16 %v345, %v344
    %v446 = vpack.c.b16 %v347, %v346
    %v447 = vpack.c.b16 %v349, %v348
    %v448 = vpack.c.b16 %v351, %v350
    %v449 = vpack.c.b16 %v353, %v352
    %v450 = vpack.c.b16 %v355, %v354
    %v451 = vpack.c.b16 %v357, %v356
    %v452 = vpack.c.b16 %v359, %v358
    %v453 = vpack.c.b16 %v361, %v360
    %v454 = vpack.c.b16 %v363, %v362
    %v455 = vpack.c.b16 %v365, %v364
    %v456 = vpack.c.b16 %v367, %v366
    %v457 = vpack.c.b16 %v369, %v368
    %v458 = vpack.c.b16 %v371, %v370
    %v459 = vpack.c.b16 %v373, %v372
    %v460 = vpack.c.b16 %v375, %v374
    %v461 = vpack.c.b16 %v377, %v376
    %v462 = vpack.c.b16 %v379, %v378
    %v463 = vpack.c.b16 %v381, %v380
    %v464 = vpack.c.b16 %v383, %v382
    %v465 = vpack.c.b16 %v385, %v384
    %v466 = vpack.c.b16 %v387, %v386
    %v467 = vpack.c.b16 %v389, %v388
    %v468 = vpack.c.b16 %v391, %v390
    %v469 = vpack.c.b16 %v393, %v392
    %v470 = vpack.c.b16 %v395, %v394
    %v471 = vpack.c.b16 %v397, %v396
    %v472 = vpack.c.b16 %v399, %v398
    %v473 = vpack.c.b16 %v401, %v400
    %v474 = vpack.c.b16 %v403, %v402
    %v475 = vpack.c.b16 %v405, %v404
    %v476 = vpack.c.b16 %v407, %v406
    %v477 = vpack.c.b16 %v409, %v408
    %v478 = vpack.c.b16 %v411, %v410
    %v479 = vpack.c.b16 %v413, %v412
    %v480 = vpack.c.b16 %v415, %v414
    %v481 = vpack.c.b16 %v417, %v416
    %v486 = vunpack.c.l.b16 %v151
    %v487 = vunpack.c.l.b16 %v152
    %v488 = vunpack.c.l.b16 %v153
    %v489 = vunpack.c.l.b16 %v154
    %v490 = vpack.c.b16 %v487, %v486
    %v491 = vpack.c.b16 %v489, %v488
    %vm494 = vcmask 261120
    %v496 = vsel %vm494, %v418, 0
    %v499 = vsel %vm494, %v419, 0
    %v502 = vsel %vm494, %v420, 0
    %v505 = vsel %vm494, %v421, 0
    %v508 = vsel %vm494, %v422, 0
    %v511 = vsel %vm494, %v423, 0
    %v514 = vsel %vm494, %v424, 0
    %v517 = vsel %vm494, %v425, 0
    %v520 = vsel %vm494, %v426, 0
    %v523 = vsel %vm494, %v427, 0
    %v526 = vsel %vm494, %v428, 0
    %v529 = vsel %vm494, %v429, 0
    %v532 = vsel %vm494, %v430, 0
    %v535 = vsel %vm494, %v431, 0
    %v538 = vsel %vm494, %v432, 0
    %v541 = vsel %vm494, %v433, 0
    %v544 = vsel %vm494, %v434, 0
    %v547 = vsel %vm494, %v435, 0
    %v550 = vsel %vm494, %v436, 0
    %v553 = vsel %vm494, %v437, 0
    %v556 = vsel %vm494, %v438, 0
    %v559 = vsel %vm494, %v439, 0
    %v562 = vsel %vm494, %v440, 0
    %v565 = vsel %vm494, %v441, 0
    %v568 = vsel %vm494, %v442, 0
    %v571 = vsel %vm494, %v443, 0
    %v574 = vsel %vm494, %v444, 0
    %v577 = vsel %vm494, %v445, 0
    %v580 = vsel %vm494, %v446, 0
    %v583 = vsel %vm494, %v447, 0
    %v586 = vsel %vm494, %v448, 0
    %v589 = vsel %vm494, %v449, 0
    %v592 = vsel %vm494, %v450, 0
    %v595 = vsel %vm494, %v451, 0
    %v598 = vsel %vm494, %v452, 0
    %v601 = vsel %vm494, %v453, 0
    %v604 = vsel %vm494, %v454, 0
    %v607 = vsel %vm494, %v455, 0
    %v610 = vsel %vm494, %v456, 0
    %v613 = vsel %vm494, %v457, 0
    %v616 = vsel %vm494, %v458, 0
    %v619 = vsel %vm494, %v459, 0
    %v622 = vsel %vm494, %v460, 0
    %v625 = vsel %vm494, %v461, 0
    %v628 = vsel %vm494, %v462, 0
    %v631 = vsel %vm494, %v463, 0
    %v634 = vsel %vm494, %v464, 0
    %v637 = vsel %vm494, %v465, 0
    %v640 = vsel %vm494, %v466, 0
    %v643 = vsel %vm494, %v467, 0
    %v646 = vsel %vm494, %v468, 0
    %v649 = vsel %vm494, %v469, 0
    %v652 = vsel %vm494, %v470, 0
    %v655 = vsel %vm494, %v471, 0
    %v658 = vsel %vm494, %v472, 0
    %v661 = vsel %vm494, %v473, 0
    %v664 = vsel %vm494, %v474, 0
    %v667 = vsel %vm494, %v475, 0
    %v670 = vsel %vm494, %v476, 0
    %v673 = vsel %vm494, %v477, 0
    %v676 = vsel %vm494, %v478, 0
    %v679 = vsel %vm494, %v479, 0
    %v682 = vsel %vm494, %v480, 0
    %v685 = vsel %vm494, %v481, 0
    %687 = vmatprep.subr.bf16.mxu0 0
    %688 = vmatpush1.bf16.msra.mxu0 %v490
    %689 = vmatprep.subr.bf16.mxu0 0
    %690 = vmatpush1.bf16.msra.mxu0 %v491
    %691 = vmatprep.subr.bf16.mxu0 0
    %692 = vmatpush1.bf16.msra.mxu0 0
    %693 = vmatprep.subr.bf16.mxu0 0
    %694 = vmatpush1.bf16.msra.mxu0 0
    %695 = vmatprep.subr.bf16.mxu0 0
    %696 = vmatpush1.bf16.msra.mxu0 0
    %697 = vmatprep.subr.bf16.mxu0 0
    %698 = vmatpush1.bf16.msra.mxu0 0
    %699 = vmatprep.subr.bf16.mxu0 0
    %700 = vmatpush1.bf16.msra.mxu0 0
    %701 = vmatprep.subr.bf16.mxu0 0
    %702 = vmatpush1.bf16.msra.mxu0 0
    %703 = vmatprep.subr.bf16.mxu0 0
    %704 = vmatpush1.bf16.msra.mxu0 0
    %705 = vmatprep.subr.bf16.mxu0 0
    %706 = vmatpush1.bf16.msra.mxu0 0
    %707 = vmatprep.subr.bf16.mxu0 0
    %708 = vmatpush1.bf16.msra.mxu0 0
    %709 = vmatprep.subr.bf16.mxu0 0
    %710 = vmatpush1.bf16.msra.mxu0 0
    %711 = vmatprep.subr.bf16.mxu0 0
    %712 = vmatpush1.bf16.msra.mxu0 0
    %713 = vmatprep.subr.bf16.mxu0 0
    %714 = vmatpush1.bf16.msra.mxu0 0
    %715 = vmatprep.subr.bf16.mxu0 0
    %716 = vmatpush1.bf16.msra.mxu0 0
    %717 = vmatprep.subr.bf16.mxu0 0
    %718 = vmatpush1.bf16.msra.mxu0 0
    %719 = vmatprep.mubr.bf16.mxu0 0
    %720 = vmatmul.mubr.bf16.gmra.mrb[0].mxu0 %v496
    %v721 = vpop.f32.mrb[0].mxu0
    %v722 = vadd.f32 %v160, %v721
    %v723 = vpop.f32.mrb[0].mxu0
    %v724 = vpop.f32.mrb[0].mxu0
    %v725 = vadd.f32 %v160, %v724
    %v726 = vpop.f32.mrb[0].mxu0
    %727 = vmatprep.mubr.bf16.mxu0 0
    %728 = vmatmul.mubr.bf16.gmra.mrb[0].mxu0 %v499
    %v729 = vpop.f32.mrb[0].mxu0
    %v730 = vadd.f32 %v160, %v729
    %v731 = vpop.f32.mrb[0].mxu0
    %v732 = vpop.f32.mrb[0].mxu0
    %v733 = vadd.f32 %v160, %v732
    %v734 = vpop.f32.mrb[0].mxu0
    %735 = vmatprep.mubr.bf16.mxu0 0
    %736 = vmatmul.mubr.bf16.gmra.mrb[0].mxu0 %v502
    %v737 = vpop.f32.mrb[0].mxu0
    %v738 = vadd.f32 %v160, %v737
    %v739 = vpop.f32.mrb[0].mxu0
    %v740 = vpop.f32.mrb[0].mxu0
    %v741 = vadd.f32 %v160, %v740
    %v742 = vpop.f32.mrb[0].mxu0
    %743 = vmatprep.mubr.bf16.mxu0 0
    %744 = vmatmul.mubr.bf16.gmra.mrb[0].mxu0 %v505
    %v745 = vpop.f32.mrb[0].mxu0
    %v746 = vadd.f32 %v160, %v745
    %v747 = vpop.f32.mrb[0].mxu0
    %v748 = vpop.f32.mrb[0].mxu0
    %v749 = vadd.f32 %v160, %v748
    %v750 = vpop.f32.mrb[0].mxu0
    %751 = vmatprep.mubr.bf16.mxu0 0
    %752 = vmatmul.mubr.bf16.gmra.mrb[0].mxu0 %v508
    %v753 = vpop.f32.mrb[0].mxu0
    %v754 = vadd.f32 %v160, %v753
    %v755 = vpop.f32.mrb[0].mxu0
    %v756 = vpop.f32.mrb[0].mxu0
    %v757 = vadd.f32 %v160, %v756
    %v758 = vpop.f32.mrb[0].mxu0
    %759 = vmatprep.mubr.bf16.mxu0 0
    %760 = vmatmul.mubr.bf16.gmra.mrb[0].mxu0 %v511
    %v761 = vpop.f32.mrb[0].mxu0
    %v762 = vadd.f32 %v160, %v761
    %v763 = vpop.f32.mrb[0].mxu0
    %v764 = vpop.f32.mrb[0].mxu0
    %v765 = vadd.f32 %v160, %v764
    %v766 = vpop.f32.mrb[0].mxu0
    %767 = vmatprep.mubr.bf16.mxu0 0
    %768 = vmatmul.mubr.bf16.gmra.mrb[0].mxu0 %v514
    %v769 = vpop.f32.mrb[0].mxu0
    %v770 = vadd.f32 %v160, %v769
    %v771 = vpop.f32.mrb[0].mxu0
    %v772 = vpop.f32.mrb[0].mxu0
    %v773 = vadd.f32 %v160, %v772
    %v774 = vpop.f32.mrb[0].mxu0
    %775 = vmatprep.mubr.bf16.mxu0 0
    %776 = vmatmul.mubr.bf16.gmra.mrb[0].mxu0 %v517
    %v777 = vpop.f32.mrb[0].mxu0
    %v778 = vadd.f32 %v160, %v777
    %v779 = vpop.f32.mrb[0].mxu0
    %v780 = vpop.f32.mrb[0].mxu0
    %v781 = vadd.f32 %v160, %v780
    %v782 = vpop.f32.mrb[0].mxu0
    %783 = vmatprep.mubr.bf16.mxu0 0
    %784 = vmatmul.mubr.bf16.gmra.mrb[0].mxu0 %v520
    %v785 = vpop.f32.mrb[0].mxu0
    %v786 = vadd.f32 %v160, %v785
    %v787 = vpop.f32.mrb[0].mxu0
    %v788 = vpop.f32.mrb[0].mxu0
    %v789 = vadd.f32 %v160, %v788
    %v790 = vpop.f32.mrb[0].mxu0
    %791 = vmatprep.mubr.bf16.mxu0 0
    %792 = vmatmul.mubr.bf16.gmra.mrb[0].mxu0 %v523
    %v793 = vpop.f32.mrb[0].mxu0
    %v794 = vadd.f32 %v160, %v793
    %v795 = vpop.f32.mrb[0].mxu0
    %v796 = vpop.f32.mrb[0].mxu0
    %v797 = vadd.f32 %v160, %v796
    %v798 = vpop.f32.mrb[0].mxu0
    %799 = vmatprep.mubr.bf16.mxu0 0
    %800 = vmatmul.mubr.bf16.gmra.mrb[0].mxu0 %v526
    %v801 = vpop.f32.mrb[0].mxu0
    %v802 = vadd.f32 %v160, %v801
    %v803 = vpop.f32.mrb[0].mxu0
    %v804 = vpop.f32.mrb[0].mxu0
    %v805 = vadd.f32 %v160, %v804
    %v806 = vpop.f32.mrb[0].mxu0
    %807 = vmatprep.mubr.bf16.mxu0 0
    %808 = vmatmul.mubr.bf16.gmra.mrb[0].mxu0 %v529
    %v809 = vpop.f32.mrb[0].mxu0
    %v810 = vadd.f32 %v160, %v809
    %v811 = vpop.f32.mrb[0].mxu0
    %v812 = vpop.f32.mrb[0].mxu0
    %v813 = vadd.f32 %v160, %v812
    %v814 = vpop.f32.mrb[0].mxu0
    %815 = vmatprep.mubr.bf16.mxu0 0
    %816 = vmatmul.mubr.bf16.gmra.mrb[0].mxu0 %v532
    %v817 = vpop.f32.mrb[0].mxu0
    %v818 = vadd.f32 %v160, %v817
    %v819 = vpop.f32.mrb[0].mxu0
    %v820 = vpop.f32.mrb[0].mxu0
    %v821 = vadd.f32 %v160, %v820
    %v822 = vpop.f32.mrb[0].mxu0
    %823 = vmatprep.mubr.bf16.mxu0 0
    %824 = vmatmul.mubr.bf16.gmra.mrb[0].mxu0 %v535
    %v825 = vpop.f32.mrb[0].mxu0
    %v826 = vadd.f32 %v160, %v825
    %v827 = vpop.f32.mrb[0].mxu0
    %v828 = vpop.f32.mrb[0].mxu0
    %v829 = vadd.f32 %v160, %v828
    %v830 = vpop.f32.mrb[0].mxu0
    %831 = vmatprep.mubr.bf16.mxu0 0
    %832 = vmatmul.mubr.bf16.gmra.mrb[0].mxu0 %v538
    %v833 = vpop.f32.mrb[0].mxu0
    %v834 = vadd.f32 %v160, %v833
    %v835 = vpop.f32.mrb[0].mxu0
    %v836 = vpop.f32.mrb[0].mxu0
    %v837 = vadd.f32 %v160, %v836
    %v838 = vpop.f32.mrb[0].mxu0
    %839 = vmatprep.mubr.bf16.mxu0 0
    %840 = vmatmul.mubr.bf16.gmra.mrb[0].mxu0 %v541
    %v841 = vpop.f32.mrb[0].mxu0
    %v842 = vadd.f32 %v160, %v841
    %v843 = vpop.f32.mrb[0].mxu0
    %v844 = vpop.f32.mrb[0].mxu0
    %v845 = vadd.f32 %v160, %v844
    %v846 = vpop.f32.mrb[0].mxu0
    %847 = vmatprep.mubr.bf16.mxu0 0
    %848 = vmatmul.mubr.bf16.gmra.mrb[0].mxu0 %v544
    %v849 = vpop.f32.mrb[0].mxu0
    %v850 = vadd.f32 %v160, %v849
    %v851 = vpop.f32.mrb[0].mxu0
    %v852 = vpop.f32.mrb[0].mxu0
    %v853 = vadd.f32 %v160, %v852
    %v854 = vpop.f32.mrb[0].mxu0
    %855 = vmatprep.mubr.bf16.mxu0 0
    %856 = vmatmul.mubr.bf16.gmra.mrb[0].mxu0 %v547
    %v857 = vpop.f32.mrb[0].mxu0
    %v858 = vadd.f32 %v160, %v857
    %v859 = vpop.f32.mrb[0].mxu0
    %v860 = vpop.f32.mrb[0].mxu0
    %v861 = vadd.f32 %v160, %v860
    %v862 = vpop.f32.mrb[0].mxu0
    %863 = vmatprep.mubr.bf16.mxu0 0
    %864 = vmatmul.mubr.bf16.gmra.mrb[0].mxu0 %v550
    %v865 = vpop.f32.mrb[0].mxu0
    %v866 = vadd.f32 %v160, %v865
    %v867 = vpop.f32.mrb[0].mxu0
    %v868 = vpop.f32.mrb[0].mxu0
    %v869 = vadd.f32 %v160, %v868
    %v870 = vpop.f32.mrb[0].mxu0
    %871 = vmatprep.mubr.bf16.mxu0 0
    %872 = vmatmul.mubr.bf16.gmra.mrb[0].mxu0 %v553
    %v873 = vpop.f32.mrb[0].mxu0
    %v874 = vadd.f32 %v160, %v873
    %v875 = vpop.f32.mrb[0].mxu0
    %v876 = vpop.f32.mrb[0].mxu0
    %v877 = vadd.f32 %v160, %v876
    %v878 = vpop.f32.mrb[0].mxu0
    %879 = vmatprep.mubr.bf16.mxu0 0
    %880 = vmatmul.mubr.bf16.gmra.mrb[0].mxu0 %v556
    %v881 = vpop.f32.mrb[0].mxu0
    %v882 = vadd.f32 %v160, %v881
    %v883 = vpop.f32.mrb[0].mxu0
    %v884 = vpop.f32.mrb[0].mxu0
    %v885 = vadd.f32 %v160, %v884
    %v886 = vpop.f32.mrb[0].mxu0
    %887 = vmatprep.mubr.bf16.mxu0 0
    %888 = vmatmul.mubr.bf16.gmra.mrb[0].mxu0 %v559
    %v889 = vpop.f32.mrb[0].mxu0
    %v890 = vadd.f32 %v160, %v889
    %v891 = vpop.f32.mrb[0].mxu0
    %v892 = vpop.f32.mrb[0].mxu0
    %v893 = vadd.f32 %v160, %v892
    %v894 = vpop.f32.mrb[0].mxu0
    %895 = vmatprep.mubr.bf16.mxu0 0
    %896 = vmatmul.mubr.bf16.gmra.mrb[0].mxu0 %v562
    %v897 = vpop.f32.mrb[0].mxu0
    %v898 = vadd.f32 %v160, %v897
    %v899 = vpop.f32.mrb[0].mxu0
    %v900 = vpop.f32.mrb[0].mxu0
    %v901 = vadd.f32 %v160, %v900
    %v902 = vpop.f32.mrb[0].mxu0
    %903 = vmatprep.mubr.bf16.mxu0 0
    %904 = vmatmul.mubr.bf16.gmra.mrb[0].mxu0 %v565
    %v905 = vpop.f32.mrb[0].mxu0
    %v906 = vadd.f32 %v160, %v905
    %v907 = vpop.f32.mrb[0].mxu0
    %v908 = vpop.f32.mrb[0].mxu0
    %v909 = vadd.f32 %v160, %v908
    %v910 = vpop.f32.mrb[0].mxu0
    %911 = vmatprep.mubr.bf16.mxu0 0
    %912 = vmatmul.mubr.bf16.gmra.mrb[0].mxu0 %v568
    %v913 = vpop.f32.mrb[0].mxu0
    %v914 = vadd.f32 %v160, %v913
    %v915 = vpop.f32.mrb[0].mxu0
    %v916 = vpop.f32.mrb[0].mxu0
    %v917 = vadd.f32 %v160, %v916
    %v918 = vpop.f32.mrb[0].mxu0
    %919 = vmatprep.mubr.bf16.mxu0 0
    %920 = vmatmul.mubr.bf16.gmra.mrb[0].mxu0 %v571
    %v921 = vpop.f32.mrb[0].mxu0
    %v922 = vadd.f32 %v160, %v921
    %v923 = vpop.f32.mrb[0].mxu0
    %v924 = vpop.f32.mrb[0].mxu0
    %v925 = vadd.f32 %v160, %v924
    %v926 = vpop.f32.mrb[0].mxu0
    %927 = vmatprep.mubr.bf16.mxu0 0
    %928 = vmatmul.mubr.bf16.gmra.mrb[0].mxu0 %v574
    %v929 = vpop.f32.mrb[0].mxu0
    %v930 = vadd.f32 %v160, %v929
    %v931 = vpop.f32.mrb[0].mxu0
    %v932 = vpop.f32.mrb[0].mxu0
    %v933 = vadd.f32 %v160, %v932
    %v934 = vpop.f32.mrb[0].mxu0
    %935 = vmatprep.mubr.bf16.mxu0 0
    %936 = vmatmul.mubr.bf16.gmra.mrb[0].mxu0 %v577
    %v937 = vpop.f32.mrb[0].mxu0
    %v938 = vadd.f32 %v160, %v937
    %v939 = vpop.f32.mrb[0].mxu0
    %v940 = vpop.f32.mrb[0].mxu0
    %v941 = vadd.f32 %v160, %v940
    %v942 = vpop.f32.mrb[0].mxu0
    %943 = vmatprep.mubr.bf16.mxu0 0
    %944 = vmatmul.mubr.bf16.gmra.mrb[0].mxu0 %v580
    %v945 = vpop.f32.mrb[0].mxu0
    %v946 = vadd.f32 %v160, %v945
    %v947 = vpop.f32.mrb[0].mxu0
    %v948 = vpop.f32.mrb[0].mxu0
    %v949 = vadd.f32 %v160, %v948
    %v950 = vpop.f32.mrb[0].mxu0
    %951 = vmatprep.mubr.bf16.mxu0 0
    %952 = vmatmul.mubr.bf16.gmra.mrb[0].mxu0 %v583
    %v953 = vpop.f32.mrb[0].mxu0
    %v954 = vadd.f32 %v160, %v953
    %v955 = vpop.f32.mrb[0].mxu0
    %v956 = vpop.f32.mrb[0].mxu0
    %v957 = vadd.f32 %v160, %v956
    %v958 = vpop.f32.mrb[0].mxu0
    %959 = vmatprep.mubr.bf16.mxu0 0
    %960 = vmatmul.mubr.bf16.gmra.mrb[0].mxu0 %v586
    %v961 = vpop.f32.mrb[0].mxu0
    %v962 = vadd.f32 %v160, %v961
    %v963 = vpop.f32.mrb[0].mxu0
    %v964 = vpop.f32.mrb[0].mxu0
    %v965 = vadd.f32 %v160, %v964
    %v966 = vpop.f32.mrb[0].mxu0
    %967 = vmatprep.mubr.bf16.mxu0 0
    %968 = vmatmul.mubr.bf16.gmra.mrb[0].mxu0 %v589
    %v969 = vpop.f32.mrb[0].mxu0
    %v970 = vadd.f32 %v160, %v969
    %v971 = vpop.f32.mrb[0].mxu0
    %v972 = vpop.f32.mrb[0].mxu0
    %v973 = vadd.f32 %v160, %v972
    %v974 = vpop.f32.mrb[0].mxu0
    %975 = vmatprep.mubr.bf16.mxu0 0
    %976 = vmatmul.mubr.bf16.gmra.mrb[0].mxu0 %v592
    %v977 = vpop.f32.mrb[0].mxu0
    %v978 = vadd.f32 %v160, %v977
    %v979 = vpop.f32.mrb[0].mxu0
    %v980 = vpop.f32.mrb[0].mxu0
    %v981 = vadd.f32 %v160, %v980
    %v982 = vpop.f32.mrb[0].mxu0
    %983 = vmatprep.mubr.bf16.mxu0 0
    %984 = vmatmul.mubr.bf16.gmra.mrb[0].mxu0 %v595
    %v985 = vpop.f32.mrb[0].mxu0
    %v986 = vadd.f32 %v160, %v985
    %v987 = vpop.f32.mrb[0].mxu0
    %v988 = vpop.f32.mrb[0].mxu0
    %v989 = vadd.f32 %v160, %v988
    %v990 = vpop.f32.mrb[0].mxu0
    %991 = vmatprep.mubr.bf16.mxu0 0
    %992 = vmatmul.mubr.bf16.gmra.mrb[0].mxu0 %v598
    %v993 = vpop.f32.mrb[0].mxu0
    %v994 = vadd.f32 %v160, %v993
    %v995 = vpop.f32.mrb[0].mxu0
    %v996 = vpop.f32.mrb[0].mxu0
    %v997 = vadd.f32 %v160, %v996
    %v998 = vpop.f32.mrb[0].mxu0
    %999 = vmatprep.mubr.bf16.mxu0 0
    %1000 = vmatmul.mubr.bf16.gmra.mrb[0].mxu0 %v601
    %v1001 = vpop.f32.mrb[0].mxu0
    %v1002 = vadd.f32 %v160, %v1001
    %v1003 = vpop.f32.mrb[0].mxu0
    %v1004 = vpop.f32.mrb[0].mxu0
    %v1005 = vadd.f32 %v160, %v1004
    %v1006 = vpop.f32.mrb[0].mxu0
    %1007 = vmatprep.mubr.bf16.mxu0 0
    %1008 = vmatmul.mubr.bf16.gmra.mrb[0].mxu0 %v604
    %v1009 = vpop.f32.mrb[0].mxu0
    %v1010 = vadd.f32 %v160, %v1009
    %v1011 = vpop.f32.mrb[0].mxu0
    %v1012 = vpop.f32.mrb[0].mxu0
    %v1013 = vadd.f32 %v160, %v1012
    %v1014 = vpop.f32.mrb[0].mxu0
    %1015 = vmatprep.mubr.bf16.mxu0 0
    %1016 = vmatmul.mubr.bf16.gmra.mrb[0].mxu0 %v607
    %v1017 = vpop.f32.mrb[0].mxu0
    %v1018 = vadd.f32 %v160, %v1017
    %v1019 = vpop.f32.mrb[0].mxu0
    %v1020 = vpop.f32.mrb[0].mxu0
    %v1021 = vadd.f32 %v160, %v1020
    %v1022 = vpop.f32.mrb[0].mxu0
    %1023 = vmatprep.mubr.bf16.mxu0 0
    %1024 = vmatmul.mubr.bf16.gmra.mrb[0].mxu0 %v610
    %v1025 = vpop.f32.mrb[0].mxu0
    %v1026 = vadd.f32 %v160, %v1025
    %v1027 = vpop.f32.mrb[0].mxu0
    %v1028 = vpop.f32.mrb[0].mxu0
    %v1029 = vadd.f32 %v160, %v1028
    %v1030 = vpop.f32.mrb[0].mxu0
    %1031 = vmatprep.mubr.bf16.mxu0 0
    %1032 = vmatmul.mubr.bf16.gmra.mrb[0].mxu0 %v613
    %v1033 = vpop.f32.mrb[0].mxu0
    %v1034 = vadd.f32 %v160, %v1033
    %v1035 = vpop.f32.mrb[0].mxu0
    %v1036 = vpop.f32.mrb[0].mxu0
    %v1037 = vadd.f32 %v160, %v1036
    %v1038 = vpop.f32.mrb[0].mxu0
    %1039 = vmatprep.mubr.bf16.mxu0 0
    %1040 = vmatmul.mubr.bf16.gmra.mrb[0].mxu0 %v616
    %v1041 = vpop.f32.mrb[0].mxu0
    %v1042 = vadd.f32 %v160, %v1041
    %v1043 = vpop.f32.mrb[0].mxu0
    %v1044 = vpop.f32.mrb[0].mxu0
    %v1045 = vadd.f32 %v160, %v1044
    %v1046 = vpop.f32.mrb[0].mxu0
    %1047 = vmatprep.mubr.bf16.mxu0 0
    %1048 = vmatmul.mubr.bf16.gmra.mrb[0].mxu0 %v619
    %v1049 = vpop.f32.mrb[0].mxu0
    %v1050 = vadd.f32 %v160, %v1049
    %v1051 = vpop.f32.mrb[0].mxu0
    %v1052 = vpop.f32.mrb[0].mxu0
    %v1053 = vadd.f32 %v160, %v1052
    %v1054 = vpop.f32.mrb[0].mxu0
    %1055 = vmatprep.mubr.bf16.mxu0 0
    %1056 = vmatmul.mubr.bf16.gmra.mrb[0].mxu0 %v622
    %v1057 = vpop.f32.mrb[0].mxu0
    %v1058 = vadd.f32 %v160, %v1057
    %v1059 = vpop.f32.mrb[0].mxu0
    %v1060 = vpop.f32.mrb[0].mxu0
    %v1061 = vadd.f32 %v160, %v1060
    %v1062 = vpop.f32.mrb[0].mxu0
    %1063 = vmatprep.mubr.bf16.mxu0 0
    %1064 = vmatmul.mubr.bf16.gmra.mrb[0].mxu0 %v625
    %v1065 = vpop.f32.mrb[0].mxu0
    %v1066 = vadd.f32 %v160, %v1065
    %v1067 = vpop.f32.mrb[0].mxu0
    %v1068 = vpop.f32.mrb[0].mxu0
    %v1069 = vadd.f32 %v160, %v1068
    %v1070 = vpop.f32.mrb[0].mxu0
    %1071 = vmatprep.mubr.bf16.mxu0 0
    %1072 = vmatmul.mubr.bf16.gmra.mrb[0].mxu0 %v628
    %v1073 = vpop.f32.mrb[0].mxu0
    %v1074 = vadd.f32 %v160, %v1073
    %v1075 = vpop.f32.mrb[0].mxu0
    %v1076 = vpop.f32.mrb[0].mxu0
    %v1077 = vadd.f32 %v160, %v1076
    %v1078 = vpop.f32.mrb[0].mxu0
    %1079 = vmatprep.mubr.bf16.mxu0 0
    %1080 = vmatmul.mubr.bf16.gmra.mrb[0].mxu0 %v631
    %v1081 = vpop.f32.mrb[0].mxu0
    %v1082 = vadd.f32 %v160, %v1081
    %v1083 = vpop.f32.mrb[0].mxu0
    %v1084 = vpop.f32.mrb[0].mxu0
    %v1085 = vadd.f32 %v160, %v1084
    %v1086 = vpop.f32.mrb[0].mxu0
    %1087 = vmatprep.mubr.bf16.mxu0 0
    %1088 = vmatmul.mubr.bf16.gmra.mrb[0].mxu0 %v634
    %v1089 = vpop.f32.mrb[0].mxu0
    %v1090 = vadd.f32 %v160, %v1089
    %v1091 = vpop.f32.mrb[0].mxu0
    %v1092 = vpop.f32.mrb[0].mxu0
    %v1093 = vadd.f32 %v160, %v1092
    %v1094 = vpop.f32.mrb[0].mxu0
    %1095 = vmatprep.mubr.bf16.mxu0 0
    %1096 = vmatmul.mubr.bf16.gmra.mrb[0].mxu0 %v637
    %v1097 = vpop.f32.mrb[0].mxu0
    %v1098 = vadd.f32 %v160, %v1097
    %v1099 = vpop.f32.mrb[0].mxu0
    %v1100 = vpop.f32.mrb[0].mxu0
    %v1101 = vadd.f32 %v160, %v1100
    %v1102 = vpop.f32.mrb[0].mxu0
    %1103 = vmatprep.mubr.bf16.mxu0 0
    %1104 = vmatmul.mubr.bf16.gmra.mrb[0].mxu0 %v640
    %v1105 = vpop.f32.mrb[0].mxu0
    %v1106 = vadd.f32 %v160, %v1105
    %v1107 = vpop.f32.mrb[0].mxu0
    %v1108 = vpop.f32.mrb[0].mxu0
    %v1109 = vadd.f32 %v160, %v1108
    %v1110 = vpop.f32.mrb[0].mxu0
    %1111 = vmatprep.mubr.bf16.mxu0 0
    %1112 = vmatmul.mubr.bf16.gmra.mrb[0].mxu0 %v643
    %v1113 = vpop.f32.mrb[0].mxu0
    %v1114 = vadd.f32 %v160, %v1113
    %v1115 = vpop.f32.mrb[0].mxu0
    %v1116 = vpop.f32.mrb[0].mxu0
    %v1117 = vadd.f32 %v160, %v1116
    %v1118 = vpop.f32.mrb[0].mxu0
    %1119 = vmatprep.mubr.bf16.mxu0 0
    %1120 = vmatmul.mubr.bf16.gmra.mrb[0].mxu0 %v646
    %v1121 = vpop.f32.mrb[0].mxu0
    %v1122 = vadd.f32 %v160, %v1121
    %v1123 = vpop.f32.mrb[0].mxu0
    %v1124 = vpop.f32.mrb[0].mxu0
    %v1125 = vadd.f32 %v160, %v1124
    %v1126 = vpop.f32.mrb[0].mxu0
    %1127 = vmatprep.mubr.bf16.mxu0 0
    %1128 = vmatmul.mubr.bf16.gmra.mrb[0].mxu0 %v649
    %v1129 = vpop.f32.mrb[0].mxu0
    %v1130 = vadd.f32 %v160, %v1129
    %v1131 = vpop.f32.mrb[0].mxu0
    %v1132 = vpop.f32.mrb[0].mxu0
    %v1133 = vadd.f32 %v160, %v1132
    %v1134 = vpop.f32.mrb[0].mxu0
    %1135 = vmatprep.mubr.bf16.mxu0 0
    %1136 = vmatmul.mubr.bf16.gmra.mrb[0].mxu0 %v652
    %v1137 = vpop.f32.mrb[0].mxu0
    %v1138 = vadd.f32 %v160, %v1137
    %v1139 = vpop.f32.mrb[0].mxu0
    %v1140 = vpop.f32.mrb[0].mxu0
    %v1141 = vadd.f32 %v160, %v1140
    %v1142 = vpop.f32.mrb[0].mxu0
    %1143 = vmatprep.mubr.bf16.mxu0 0
    %1144 = vmatmul.mubr.bf16.gmra.mrb[0].mxu0 %v655
    %v1145 = vpop.f32.mrb[0].mxu0
    %v1146 = vadd.f32 %v160, %v1145
    %v1147 = vpop.f32.mrb[0].mxu0
    %v1148 = vpop.f32.mrb[0].mxu0
    %v1149 = vadd.f32 %v160, %v1148
    %v1150 = vpop.f32.mrb[0].mxu0
    %1151 = vmatprep.mubr.bf16.mxu0 0
    %1152 = vmatmul.mubr.bf16.gmra.mrb[0].mxu0 %v658
    %v1153 = vpop.f32.mrb[0].mxu0
    %v1154 = vadd.f32 %v160, %v1153
    %v1155 = vpop.f32.mrb[0].mxu0
    %v1156 = vpop.f32.mrb[0].mxu0
    %v1157 = vadd.f32 %v160, %v1156
    %v1158 = vpop.f32.mrb[0].mxu0
    %1159 = vmatprep.mubr.bf16.mxu0 0
    %1160 = vmatmul.mubr.bf16.gmra.mrb[0].mxu0 %v661
    %v1161 = vpop.f32.mrb[0].mxu0
    %v1162 = vadd.f32 %v160, %v1161
    %v1163 = vpop.f32.mrb[0].mxu0
    %v1164 = vpop.f32.mrb[0].mxu0
    %v1165 = vadd.f32 %v160, %v1164
    %v1166 = vpop.f32.mrb[0].mxu0
    %1167 = vmatprep.mubr.bf16.mxu0 0
    %1168 = vmatmul.mubr.bf16.gmra.mrb[0].mxu0 %v664
    %v1169 = vpop.f32.mrb[0].mxu0
    %v1170 = vadd.f32 %v160, %v1169
    %v1171 = vpop.f32.mrb[0].mxu0
    %v1172 = vpop.f32.mrb[0].mxu0
    %v1173 = vadd.f32 %v160, %v1172
    %v1174 = vpop.f32.mrb[0].mxu0
    %1175 = vmatprep.mubr.bf16.mxu0 0
    %1176 = vmatmul.mubr.bf16.gmra.mrb[0].mxu0 %v667
    %v1177 = vpop.f32.mrb[0].mxu0
    %v1178 = vadd.f32 %v160, %v1177
    %v1179 = vpop.f32.mrb[0].mxu0
    %v1180 = vpop.f32.mrb[0].mxu0
    %v1181 = vadd.f32 %v160, %v1180
    %v1182 = vpop.f32.mrb[0].mxu0
    %1183 = vmatprep.mubr.bf16.mxu0 0
    %1184 = vmatmul.mubr.bf16.gmra.mrb[0].mxu0 %v670
    %v1185 = vpop.f32.mrb[0].mxu0
    %v1186 = vadd.f32 %v160, %v1185
    %v1187 = vpop.f32.mrb[0].mxu0
    %v1188 = vpop.f32.mrb[0].mxu0
    %v1189 = vadd.f32 %v160, %v1188
    %v1190 = vpop.f32.mrb[0].mxu0
    %1191 = vmatprep.mubr.bf16.mxu0 0
    %1192 = vmatmul.mubr.bf16.gmra.mrb[0].mxu0 %v673
    %v1193 = vpop.f32.mrb[0].mxu0
    %v1194 = vadd.f32 %v160, %v1193
    %v1195 = vpop.f32.mrb[0].mxu0
    %v1196 = vpop.f32.mrb[0].mxu0
    %v1197 = vadd.f32 %v160, %v1196
    %v1198 = vpop.f32.mrb[0].mxu0
    %1199 = vmatprep.mubr.bf16.mxu0 0
    %1200 = vmatmul.mubr.bf16.gmra.mrb[0].mxu0 %v676
    %v1201 = vpop.f32.mrb[0].mxu0
    %v1202 = vadd.f32 %v160, %v1201
    %v1203 = vpop.f32.mrb[0].mxu0
    %v1204 = vpop.f32.mrb[0].mxu0
    %v1205 = vadd.f32 %v160, %v1204
    %v1206 = vpop.f32.mrb[0].mxu0
    %1207 = vmatprep.mubr.bf16.mxu0 0
    %1208 = vmatmul.mubr.bf16.gmra.mrb[0].mxu0 %v679
    %v1209 = vpop.f32.mrb[0].mxu0
    %v1210 = vadd.f32 %v160, %v1209
    %v1211 = vpop.f32.mrb[0].mxu0
    %v1212 = vpop.f32.mrb[0].mxu0
    %v1213 = vadd.f32 %v160, %v1212
    %v1214 = vpop.f32.mrb[0].mxu0
    %1215 = vmatprep.mubr.bf16.mxu0 0
    %1216 = vmatmul.mubr.bf16.gmra.mrb[0].mxu0 %v682
    %v1217 = vpop.f32.mrb[0].mxu0
    %v1218 = vadd.f32 %v160, %v1217
    %v1219 = vpop.f32.mrb[0].mxu0
    %v1220 = vpop.f32.mrb[0].mxu0
    %v1221 = vadd.f32 %v160, %v1220
    %v1222 = vpop.f32.mrb[0].mxu0
    %1223 = vmatprep.mubr.bf16.mxu0 0
    %1224 = vmatmul.mubr.bf16.gmra.mrb[0].mxu0 %v685
    %v1225 = vpop.f32.mrb[0].mxu0
    %v1226 = vadd.f32 %v160, %v1225
    %v1227 = vpop.f32.mrb[0].mxu0
    %v1228 = vpop.f32.mrb[0].mxu0
    %v1229 = vadd.f32 %v160, %v1228
    %v1230 = vpop.f32.mrb[0].mxu0
    %1231 = vdwg.mxu0
    %v1232 = vmul.f32 %v722, 0.5
    %v1233 = vmul.f32 %v725, 0.5
    %v1234 = vmul.f32 %v730, 0.5
    %v1235 = vmul.f32 %v733, 0.5
    %v1236 = vmul.f32 %v738, 0.5
    %v1237 = vmul.f32 %v741, 0.5
    %v1238 = vmul.f32 %v746, 0.5
    %v1239 = vmul.f32 %v749, 0.5
    %v1240 = vmul.f32 %v754, 0.5
    %v1241 = vmul.f32 %v757, 0.5
    %v1242 = vmul.f32 %v762, 0.5
    %v1243 = vmul.f32 %v765, 0.5
    %v1244 = vmul.f32 %v770, 0.5
    %v1245 = vmul.f32 %v773, 0.5
    %v1246 = vmul.f32 %v778, 0.5
    %v1247 = vmul.f32 %v781, 0.5
    %v1248 = vmul.f32 %v786, 0.5
    %v1249 = vmul.f32 %v789, 0.5
    %v1250 = vmul.f32 %v794, 0.5
    %v1251 = vmul.f32 %v797, 0.5
    %v1252 = vmul.f32 %v802, 0.5
    %v1253 = vmul.f32 %v805, 0.5
    %v1254 = vmul.f32 %v810, 0.5
    %v1255 = vmul.f32 %v813, 0.5
    %v1256 = vmul.f32 %v818, 0.5
    %v1257 = vmul.f32 %v821, 0.5
    %v1258 = vmul.f32 %v826, 0.5
    %v1259 = vmul.f32 %v829, 0.5
    %v1260 = vmul.f32 %v834, 0.5
    %v1261 = vmul.f32 %v837, 0.5
    %v1262 = vmul.f32 %v842, 0.5
    %v1263 = vmul.f32 %v845, 0.5
    %v1264 = vmul.f32 %v850, 0.5
    %v1265 = vmul.f32 %v853, 0.5
    %v1266 = vmul.f32 %v858, 0.5
    %v1267 = vmul.f32 %v861, 0.5
    %v1268 = vmul.f32 %v866, 0.5
    %v1269 = vmul.f32 %v869, 0.5
    %v1270 = vmul.f32 %v874, 0.5
    %v1271 = vmul.f32 %v877, 0.5
    %v1272 = vmul.f32 %v882, 0.5
    %v1273 = vmul.f32 %v885, 0.5
    %v1274 = vmul.f32 %v890, 0.5
    %v1275 = vmul.f32 %v893, 0.5
    %v1276 = vmul.f32 %v898, 0.5
    %v1277 = vmul.f32 %v901, 0.5
    %v1278 = vmul.f32 %v906, 0.5
    %v1279 = vmul.f32 %v909, 0.5
    %v1280 = vmul.f32 %v914, 0.5
    %v1281 = vmul.f32 %v917, 0.5
    %v1282 = vmul.f32 %v922, 0.5
    %v1283 = vmul.f32 %v925, 0.5
    %v1284 = vmul.f32 %v930, 0.5
    %v1285 = vmul.f32 %v933, 0.5
    %v1286 = vmul.f32 %v938, 0.5
    %v1287 = vmul.f32 %v941, 0.5
    %v1288 = vmul.f32 %v946, 0.5
    %v1289 = vmul.f32 %v949, 0.5
    %v1290 = vmul.f32 %v954, 0.5
    %v1291 = vmul.f32 %v957, 0.5
    %v1292 = vmul.f32 %v962, 0.5
    %v1293 = vmul.f32 %v965, 0.5
    %v1294 = vmul.f32 %v970, 0.5
    %v1295 = vmul.f32 %v973, 0.5
    %v1296 = vmul.f32 %v978, 0.5
    %v1297 = vmul.f32 %v981, 0.5
    %v1298 = vmul.f32 %v986, 0.5
    %v1299 = vmul.f32 %v989, 0.5
    %v1300 = vmul.f32 %v994, 0.5
    %v1301 = vmul.f32 %v997, 0.5
    %v1302 = vmul.f32 %v1002, 0.5
    %v1303 = vmul.f32 %v1005, 0.5
    %v1304 = vmul.f32 %v1010, 0.5
    %v1305 = vmul.f32 %v1013, 0.5
    %v1306 = vmul.f32 %v1018, 0.5
    %v1307 = vmul.f32 %v1021, 0.5
    %v1308 = vmul.f32 %v1026, 0.5
    %v1309 = vmul.f32 %v1029, 0.5
    %v1310 = vmul.f32 %v1034, 0.5
    %v1311 = vmul.f32 %v1037, 0.5
    %v1312 = vmul.f32 %v1042, 0.5
    %v1313 = vmul.f32 %v1045, 0.5
    %v1314 = vmul.f32 %v1050, 0.5
    %v1315 = vmul.f32 %v1053, 0.5
    %v1316 = vmul.f32 %v1058, 0.5
    %v1317 = vmul.f32 %v1061, 0.5
    %v1318 = vmul.f32 %v1066, 0.5
    %v1319 = vmul.f32 %v1069, 0.5
    %v1320 = vmul.f32 %v1074, 0.5
    %v1321 = vmul.f32 %v1077, 0.5
    %v1322 = vmul.f32 %v1082, 0.5
    %v1323 = vmul.f32 %v1085, 0.5
    %v1324 = vmul.f32 %v1090, 0.5
    %v1325 = vmul.f32 %v1093, 0.5
    %v1326 = vmul.f32 %v1098, 0.5
    %v1327 = vmul.f32 %v1101, 0.5
    %v1328 = vmul.f32 %v1106, 0.5
    %v1329 = vmul.f32 %v1109, 0.5
    %v1330 = vmul.f32 %v1114, 0.5
    %v1331 = vmul.f32 %v1117, 0.5
    %v1332 = vmul.f32 %v1122, 0.5
    %v1333 = vmul.f32 %v1125, 0.5
    %v1334 = vmul.f32 %v1130, 0.5
    %v1335 = vmul.f32 %v1133, 0.5
    %v1336 = vmul.f32 %v1138, 0.5
    %v1337 = vmul.f32 %v1141, 0.5
    %v1338 = vmul.f32 %v1146, 0.5
    %v1339 = vmul.f32 %v1149, 0.5
    %v1340 = vmul.f32 %v1154, 0.5
    %v1341 = vmul.f32 %v1157, 0.5
    %v1342 = vmul.f32 %v1162, 0.5
    %v1343 = vmul.f32 %v1165, 0.5
    %v1344 = vmul.f32 %v1170, 0.5
    %v1345 = vmul.f32 %v1173, 0.5
    %v1346 = vmul.f32 %v1178, 0.5
    %v1347 = vmul.f32 %v1181, 0.5
    %v1348 = vmul.f32 %v1186, 0.5
    %v1349 = vmul.f32 %v1189, 0.5
    %v1350 = vmul.f32 %v1194, 0.5
    %v1351 = vmul.f32 %v1197, 0.5
    %v1352 = vmul.f32 %v1202, 0.5
    %v1353 = vmul.f32 %v1205, 0.5
    %v1354 = vmul.f32 %v1210, 0.5
    %v1355 = vmul.f32 %v1213, 0.5
    %v1356 = vmul.f32 %v1218, 0.5
    %v1357 = vmul.f32 %v1221, 0.5
    %v1358 = vmul.f32 %v1226, 0.5
    %v1359 = vmul.f32 %v1229, 0.5
    %v1360 = vmul.f32 %v722, 0.044715
    %v1361 = vmul.f32 %v725, 0.044715
    %v1362 = vmul.f32 %v730, 0.044715
    %v1363 = vmul.f32 %v733, 0.044715
    %v1364 = vmul.f32 %v738, 0.044715
    %v1365 = vmul.f32 %v741, 0.044715
    %v1366 = vmul.f32 %v746, 0.044715
    %v1367 = vmul.f32 %v749, 0.044715
    %v1368 = vmul.f32 %v754, 0.044715
    %v1369 = vmul.f32 %v757, 0.044715
    %v1370 = vmul.f32 %v762, 0.044715
    %v1371 = vmul.f32 %v765, 0.044715
    %v1372 = vmul.f32 %v770, 0.044715
    %v1373 = vmul.f32 %v773, 0.044715
    %v1374 = vmul.f32 %v778, 0.044715
    %v1375 = vmul.f32 %v781, 0.044715
    %v1376 = vmul.f32 %v786, 0.044715
    %v1377 = vmul.f32 %v789, 0.044715
    %v1378 = vmul.f32 %v794, 0.044715
    %v1379 = vmul.f32 %v797, 0.044715
    %v1380 = vmul.f32 %v802, 0.044715
    %v1381 = vmul.f32 %v805, 0.044715
    %v1382 = vmul.f32 %v810, 0.044715
    %v1383 = vmul.f32 %v813, 0.044715
    %v1384 = vmul.f32 %v818, 0.044715
    %v1385 = vmul.f32 %v821, 0.044715
    %v1386 = vmul.f32 %v826, 0.044715
    %v1387 = vmul.f32 %v829, 0.044715
    %v1388 = vmul.f32 %v834, 0.044715
    %v1389 = vmul.f32 %v837, 0.044715
    %v1390 = vmul.f32 %v842, 0.044715
    %v1391 = vmul.f32 %v845, 0.044715
    %v1392 = vmul.f32 %v850, 0.044715
    %v1393 = vmul.f32 %v853, 0.044715
    %v1394 = vmul.f32 %v858, 0.044715
    %v1395 = vmul.f32 %v861, 0.044715
    %v1396 = vmul.f32 %v866, 0.044715
    %v1397 = vmul.f32 %v869, 0.044715
    %v1398 = vmul.f32 %v874, 0.044715
    %v1399 = vmul.f32 %v877, 0.044715
    %v1400 = vmul.f32 %v882, 0.044715
    %v1401 = vmul.f32 %v885, 0.044715
    %v1402 = vmul.f32 %v890, 0.044715
    %v1403 = vmul.f32 %v893, 0.044715
    %v1404 = vmul.f32 %v898, 0.044715
    %v1405 = vmul.f32 %v901, 0.044715
    %v1406 = vmul.f32 %v906, 0.044715
    %v1407 = vmul.f32 %v909, 0.044715
    %v1408 = vmul.f32 %v914, 0.044715
    %v1409 = vmul.f32 %v917, 0.044715
    %v1410 = vmul.f32 %v922, 0.044715
    %v1411 = vmul.f32 %v925, 0.044715
    %v1412 = vmul.f32 %v930, 0.044715
    %v1413 = vmul.f32 %v933, 0.044715
    %v1414 = vmul.f32 %v938, 0.044715
    %v1415 = vmul.f32 %v941, 0.044715
    %v1416 = vmul.f32 %v946, 0.044715
    %v1417 = vmul.f32 %v949, 0.044715
    %v1418 = vmul.f32 %v954, 0.044715
    %v1419 = vmul.f32 %v957, 0.044715
    %v1420 = vmul.f32 %v962, 0.044715
    %v1421 = vmul.f32 %v965, 0.044715
    %v1422 = vmul.f32 %v970, 0.044715
    %v1423 = vmul.f32 %v973, 0.044715
    %v1424 = vmul.f32 %v978, 0.044715
    %v1425 = vmul.f32 %v981, 0.044715
    %v1426 = vmul.f32 %v986, 0.044715
    %v1427 = vmul.f32 %v989, 0.044715
    %v1428 = vmul.f32 %v994, 0.044715
    %v1429 = vmul.f32 %v997, 0.044715
    %v1430 = vmul.f32 %v1002, 0.044715
    %v1431 = vmul.f32 %v1005, 0.044715
    %v1432 = vmul.f32 %v1010, 0.044715
    %v1433 = vmul.f32 %v1013, 0.044715
    %v1434 = vmul.f32 %v1018, 0.044715
    %v1435 = vmul.f32 %v1021, 0.044715
    %v1436 = vmul.f32 %v1026, 0.044715
    %v1437 = vmul.f32 %v1029, 0.044715
    %v1438 = vmul.f32 %v1034, 0.044715
    %v1439 = vmul.f32 %v1037, 0.044715
    %v1440 = vmul.f32 %v1042, 0.044715
    %v1441 = vmul.f32 %v1045, 0.044715
    %v1442 = vmul.f32 %v1050, 0.044715
    %v1443 = vmul.f32 %v1053, 0.044715
    %v1444 = vmul.f32 %v1058, 0.044715
    %v1445 = vmul.f32 %v1061, 0.044715
    %v1446 = vmul.f32 %v1066, 0.044715
    %v1447 = vmul.f32 %v1069, 0.044715
    %v1448 = vmul.f32 %v1074, 0.044715
    %v1449 = vmul.f32 %v1077, 0.044715
    %v1450 = vmul.f32 %v1082, 0.044715
    %v1451 = vmul.f32 %v1085, 0.044715
    %v1452 = vmul.f32 %v1090, 0.044715
    %v1453 = vmul.f32 %v1093, 0.044715
    %v1454 = vmul.f32 %v1098, 0.044715
    %v1455 = vmul.f32 %v1101, 0.044715
    %v1456 = vmul.f32 %v1106, 0.044715
    %v1457 = vmul.f32 %v1109, 0.044715
    %v1458 = vmul.f32 %v1114, 0.044715
    %v1459 = vmul.f32 %v1117, 0.044715
    %v1460 = vmul.f32 %v1122, 0.044715
    %v1461 = vmul.f32 %v1125, 0.044715
    %v1462 = vmul.f32 %v1130, 0.044715
    %v1463 = vmul.f32 %v1133, 0.044715
    %v1464 = vmul.f32 %v1138, 0.044715
    %v1465 = vmul.f32 %v1141, 0.044715
    %v1466 = vmul.f32 %v1146, 0.044715
    %v1467 = vmul.f32 %v1149, 0.044715
    %v1468 = vmul.f32 %v1154, 0.044715
    %v1469 = vmul.f32 %v1157, 0.044715
    %v1470 = vmul.f32 %v1162, 0.044715
    %v1471 = vmul.f32 %v1165, 0.044715
    %v1472 = vmul.f32 %v1170, 0.044715
    %v1473 = vmul.f32 %v1173, 0.044715
    %v1474 = vmul.f32 %v1178, 0.044715
    %v1475 = vmul.f32 %v1181, 0.044715
    %v1476 = vmul.f32 %v1186, 0.044715
    %v1477 = vmul.f32 %v1189, 0.044715
    %v1478 = vmul.f32 %v1194, 0.044715
    %v1479 = vmul.f32 %v1197, 0.044715
    %v1480 = vmul.f32 %v1202, 0.044715
    %v1481 = vmul.f32 %v1205, 0.044715
    %v1482 = vmul.f32 %v1210, 0.044715
    %v1483 = vmul.f32 %v1213, 0.044715
    %v1484 = vmul.f32 %v1218, 0.044715
    %v1485 = vmul.f32 %v1221, 0.044715
    %v1486 = vmul.f32 %v1226, 0.044715
    %v1487 = vmul.f32 %v1229, 0.044715
    %v1488 = vmul.f32 %v1360, %v722
    %v1489 = vmul.f32 %v1361, %v725
    %v1490 = vmul.f32 %v1362, %v730
    %v1491 = vmul.f32 %v1363, %v733
    %v1492 = vmul.f32 %v1364, %v738
    %v1493 = vmul.f32 %v1365, %v741
    %v1494 = vmul.f32 %v1366, %v746
    %v1495 = vmul.f32 %v1367, %v749
    %v1496 = vmul.f32 %v1368, %v754
    %v1497 = vmul.f32 %v1369, %v757
    %v1498 = vmul.f32 %v1370, %v762
    %v1499 = vmul.f32 %v1371, %v765
    %v1500 = vmul.f32 %v1372, %v770
    %v1501 = vmul.f32 %v1373, %v773
    %v1502 = vmul.f32 %v1374, %v778
    %v1503 = vmul.f32 %v1375, %v781
    %v1504 = vmul.f32 %v1376, %v786
    %v1505 = vmul.f32 %v1377, %v789
    %v1506 = vmul.f32 %v1378, %v794
    %v1507 = vmul.f32 %v1379, %v797
    %v1508 = vmul.f32 %v1380, %v802
    %v1509 = vmul.f32 %v1381, %v805
    %v1510 = vmul.f32 %v1382, %v810
    %v1511 = vmul.f32 %v1383, %v813
    %v1512 = vmul.f32 %v1384, %v818
    %v1513 = vmul.f32 %v1385, %v821
    %v1514 = vmul.f32 %v1386, %v826
    %v1515 = vmul.f32 %v1387, %v829
    %v1516 = vmul.f32 %v1388, %v834
    %v1517 = vmul.f32 %v1389, %v837
    %v1518 = vmul.f32 %v1390, %v842
    %v1519 = vmul.f32 %v1391, %v845
    %v1520 = vmul.f32 %v1392, %v850
    %v1521 = vmul.f32 %v1393, %v853
    %v1522 = vmul.f32 %v1394, %v858
    %v1523 = vmul.f32 %v1395, %v861
    %v1524 = vmul.f32 %v1396, %v866
    %v1525 = vmul.f32 %v1397, %v869
    %v1526 = vmul.f32 %v1398, %v874
    %v1527 = vmul.f32 %v1399, %v877
    %v1528 = vmul.f32 %v1400, %v882
    %v1529 = vmul.f32 %v1401, %v885
    %v1530 = vmul.f32 %v1402, %v890
    %v1531 = vmul.f32 %v1403, %v893
    %v1532 = vmul.f32 %v1404, %v898
    %v1533 = vmul.f32 %v1405, %v901
    %v1534 = vmul.f32 %v1406, %v906
    %v1535 = vmul.f32 %v1407, %v909
    %v1536 = vmul.f32 %v1408, %v914
    %v1537 = vmul.f32 %v1409, %v917
    %v1538 = vmul.f32 %v1410, %v922
    %v1539 = vmul.f32 %v1411, %v925
    %v1540 = vmul.f32 %v1412, %v930
    %v1541 = vmul.f32 %v1413, %v933
    %v1542 = vmul.f32 %v1414, %v938
    %v1543 = vmul.f32 %v1415, %v941
    %v1544 = vmul.f32 %v1416, %v946
    %v1545 = vmul.f32 %v1417, %v949
    %v1546 = vmul.f32 %v1418, %v954
    %v1547 = vmul.f32 %v1419, %v957
    %v1548 = vmul.f32 %v1420, %v962
    %v1549 = vmul.f32 %v1421, %v965
    %v1550 = vmul.f32 %v1422, %v970
    %v1551 = vmul.f32 %v1423, %v973
    %v1552 = vmul.f32 %v1424, %v978
    %v1553 = vmul.f32 %v1425, %v981
    %v1554 = vmul.f32 %v1426, %v986
    %v1555 = vmul.f32 %v1427, %v989
    %v1556 = vmul.f32 %v1428, %v994
    %v1557 = vmul.f32 %v1429, %v997
    %v1558 = vmul.f32 %v1430, %v1002
    %v1559 = vmul.f32 %v1431, %v1005
    %v1560 = vmul.f32 %v1432, %v1010
    %v1561 = vmul.f32 %v1433, %v1013
    %v1562 = vmul.f32 %v1434, %v1018
    %v1563 = vmul.f32 %v1435, %v1021
    %v1564 = vmul.f32 %v1436, %v1026
    %v1565 = vmul.f32 %v1437, %v1029
    %v1566 = vmul.f32 %v1438, %v1034
    %v1567 = vmul.f32 %v1439, %v1037
    %v1568 = vmul.f32 %v1440, %v1042
    %v1569 = vmul.f32 %v1441, %v1045
    %v1570 = vmul.f32 %v1442, %v1050
    %v1571 = vmul.f32 %v1443, %v1053
    %v1572 = vmul.f32 %v1444, %v1058
    %v1573 = vmul.f32 %v1445, %v1061
    %v1574 = vmul.f32 %v1446, %v1066
    %v1575 = vmul.f32 %v1447, %v1069
    %v1576 = vmul.f32 %v1448, %v1074
    %v1577 = vmul.f32 %v1449, %v1077
    %v1578 = vmul.f32 %v1450, %v1082
    %v1579 = vmul.f32 %v1451, %v1085
    %v1580 = vmul.f32 %v1452, %v1090
    %v1581 = vmul.f32 %v1453, %v1093
    %v1582 = vmul.f32 %v1454, %v1098
    %v1583 = vmul.f32 %v1455, %v1101
    %v1584 = vmul.f32 %v1456, %v1106
    %v1585 = vmul.f32 %v1457, %v1109
    %v1586 = vmul.f32 %v1458, %v1114
    %v1587 = vmul.f32 %v1459, %v1117
    %v1588 = vmul.f32 %v1460, %v1122
    %v1589 = vmul.f32 %v1461, %v1125
    %v1590 = vmul.f32 %v1462, %v1130
    %v1591 = vmul.f32 %v1463, %v1133
    %v1592 = vmul.f32 %v1464, %v1138
    %v1593 = vmul.f32 %v1465, %v1141
    %v1594 = vmul.f32 %v1466, %v1146
    %v1595 = vmul.f32 %v1467, %v1149
    %v1596 = vmul.f32 %v1468, %v1154
    %v1597 = vmul.f32 %v1469, %v1157
    %v1598 = vmul.f32 %v1470, %v1162
    %v1599 = vmul.f32 %v1471, %v1165
    %v1600 = vmul.f32 %v1472, %v1170
    %v1601 = vmul.f32 %v1473, %v1173
    %v1602 = vmul.f32 %v1474, %v1178
    %v1603 = vmul.f32 %v1475, %v1181
    %v1604 = vmul.f32 %v1476, %v1186
    %v1605 = vmul.f32 %v1477, %v1189
    %v1606 = vmul.f32 %v1478, %v1194
    %v1607 = vmul.f32 %v1479, %v1197
    %v1608 = vmul.f32 %v1480, %v1202
    %v1609 = vmul.f32 %v1481, %v1205
    %v1610 = vmul.f32 %v1482, %v1210
    %v1611 = vmul.f32 %v1483, %v1213
    %v1612 = vmul.f32 %v1484, %v1218
    %v1613 = vmul.f32 %v1485, %v1221
    %v1614 = vmul.f32 %v1486, %v1226
    %v1615 = vmul.f32 %v1487, %v1229
    %v1616 = vmul.f32 %v1488, %v722
    %v1617 = vmul.f32 %v1489, %v725
    %v1618 = vmul.f32 %v1490, %v730
    %v1619 = vmul.f32 %v1491, %v733
    %v1620 = vmul.f32 %v1492, %v738
    %v1621 = vmul.f32 %v1493, %v741
    %v1622 = vmul.f32 %v1494, %v746
    %v1623 = vmul.f32 %v1495, %v749
    %v1624 = vmul.f32 %v1496, %v754
    %v1625 = vmul.f32 %v1497, %v757
    %v1626 = vmul.f32 %v1498, %v762
    %v1627 = vmul.f32 %v1499, %v765
    %v1628 = vmul.f32 %v1500, %v770
    %v1629 = vmul.f32 %v1501, %v773
    %v1630 = vmul.f32 %v1502, %v778
    %v1631 = vmul.f32 %v1503, %v781
    %v1632 = vmul.f32 %v1504, %v786
    %v1633 = vmul.f32 %v1505, %v789
    %v1634 = vmul.f32 %v1506, %v794
    %v1635 = vmul.f32 %v1507, %v797
    %v1636 = vmul.f32 %v1508, %v802
    %v1637 = vmul.f32 %v1509, %v805
    %v1638 = vmul.f32 %v1510, %v810
    %v1639 = vmul.f32 %v1511, %v813
    %v1640 = vmul.f32 %v1512, %v818
    %v1641 = vmul.f32 %v1513, %v821
    %v1642 = vmul.f32 %v1514, %v826
    %v1643 = vmul.f32 %v1515, %v829
    %v1644 = vmul.f32 %v1516, %v834
    %v1645 = vmul.f32 %v1517, %v837
    %v1646 = vmul.f32 %v1518, %v842
    %v1647 = vmul.f32 %v1519, %v845
    %v1648 = vmul.f32 %v1520, %v850
    %v1649 = vmul.f32 %v1521, %v853
    %v1650 = vmul.f32 %v1522, %v858
    %v1651 = vmul.f32 %v1523, %v861
    %v1652 = vmul.f32 %v1524, %v866
    %v1653 = vmul.f32 %v1525, %v869
    %v1654 = vmul.f32 %v1526, %v874
    %v1655 = vmul.f32 %v1527, %v877
    %v1656 = vmul.f32 %v1528, %v882
    %v1657 = vmul.f32 %v1529, %v885
    %v1658 = vmul.f32 %v1530, %v890
    %v1659 = vmul.f32 %v1531, %v893
    %v1660 = vmul.f32 %v1532, %v898
    %v1661 = vmul.f32 %v1533, %v901
    %v1662 = vmul.f32 %v1534, %v906
    %v1663 = vmul.f32 %v1535, %v909
    %v1664 = vmul.f32 %v1536, %v914
    %v1665 = vmul.f32 %v1537, %v917
    %v1666 = vmul.f32 %v1538, %v922
    %v1667 = vmul.f32 %v1539, %v925
    %v1668 = vmul.f32 %v1540, %v930
    %v1669 = vmul.f32 %v1541, %v933
    %v1670 = vmul.f32 %v1542, %v938
    %v1671 = vmul.f32 %v1543, %v941
    %v1672 = vmul.f32 %v1544, %v946
    %v1673 = vmul.f32 %v1545, %v949
    %v1674 = vmul.f32 %v1546, %v954
    %v1675 = vmul.f32 %v1547, %v957
    %v1676 = vmul.f32 %v1548, %v962
    %v1677 = vmul.f32 %v1549, %v965
    %v1678 = vmul.f32 %v1550, %v970
    %v1679 = vmul.f32 %v1551, %v973
    %v1680 = vmul.f32 %v1552, %v978
    %v1681 = vmul.f32 %v1553, %v981
    %v1682 = vmul.f32 %v1554, %v986
    %v1683 = vmul.f32 %v1555, %v989
    %v1684 = vmul.f32 %v1556, %v994
    %v1685 = vmul.f32 %v1557, %v997
    %v1686 = vmul.f32 %v1558, %v1002
    %v1687 = vmul.f32 %v1559, %v1005
    %v1688 = vmul.f32 %v1560, %v1010
    %v1689 = vmul.f32 %v1561, %v1013
    %v1690 = vmul.f32 %v1562, %v1018
    %v1691 = vmul.f32 %v1563, %v1021
    %v1692 = vmul.f32 %v1564, %v1026
    %v1693 = vmul.f32 %v1565, %v1029
    %v1694 = vmul.f32 %v1566, %v1034
    %v1695 = vmul.f32 %v1567, %v1037
    %v1696 = vmul.f32 %v1568, %v1042
    %v1697 = vmul.f32 %v1569, %v1045
    %v1698 = vmul.f32 %v1570, %v1050
    %v1699 = vmul.f32 %v1571, %v1053
    %v1700 = vmul.f32 %v1572, %v1058
    %v1701 = vmul.f32 %v1573, %v1061
    %v1702 = vmul.f32 %v1574, %v1066
    %v1703 = vmul.f32 %v1575, %v1069
    %v1704 = vmul.f32 %v1576, %v1074
    %v1705 = vmul.f32 %v1577, %v1077
    %v1706 = vmul.f32 %v1578, %v1082
    %v1707 = vmul.f32 %v1579, %v1085
    %v1708 = vmul.f32 %v1580, %v1090
    %v1709 = vmul.f32 %v1581, %v1093
    %v1710 = vmul.f32 %v1582, %v1098
    %v1711 = vmul.f32 %v1583, %v1101
    %v1712 = vmul.f32 %v1584, %v1106
    %v1713 = vmul.f32 %v1585, %v1109
    %v1714 = vmul.f32 %v1586, %v1114
    %v1715 = vmul.f32 %v1587, %v1117
    %v1716 = vmul.f32 %v1588, %v1122
    %v1717 = vmul.f32 %v1589, %v1125
    %v1718 = vmul.f32 %v1590, %v1130
    %v1719 = vmul.f32 %v1591, %v1133
    %v1720 = vmul.f32 %v1592, %v1138
    %v1721 = vmul.f32 %v1593, %v1141
    %v1722 = vmul.f32 %v1594, %v1146
    %v1723 = vmul.f32 %v1595, %v1149
    %v1724 = vmul.f32 %v1596, %v1154
    %v1725 = vmul.f32 %v1597, %v1157
    %v1726 = vmul.f32 %v1598, %v1162
    %v1727 = vmul.f32 %v1599, %v1165
    %v1728 = vmul.f32 %v1600, %v1170
    %v1729 = vmul.f32 %v1601, %v1173
    %v1730 = vmul.f32 %v1602, %v1178
    %v1731 = vmul.f32 %v1603, %v1181
    %v1732 = vmul.f32 %v1604, %v1186
    %v1733 = vmul.f32 %v1605, %v1189
    %v1734 = vmul.f32 %v1606, %v1194
    %v1735 = vmul.f32 %v1607, %v1197
    %v1736 = vmul.f32 %v1608, %v1202
    %v1737 = vmul.f32 %v1609, %v1205
    %v1738 = vmul.f32 %v1610, %v1210
    %v1739 = vmul.f32 %v1611, %v1213
    %v1740 = vmul.f32 %v1612, %v1218
    %v1741 = vmul.f32 %v1613, %v1221
    %v1742 = vmul.f32 %v1614, %v1226
    %v1743 = vmul.f32 %v1615, %v1229
    %v1744 = vadd.f32 %v722, %v1616
    %v1745 = vadd.f32 %v725, %v1617
    %v1746 = vadd.f32 %v730, %v1618
    %v1747 = vadd.f32 %v733, %v1619
    %v1748 = vadd.f32 %v738, %v1620
    %v1749 = vadd.f32 %v741, %v1621
    %v1750 = vadd.f32 %v746, %v1622
    %v1751 = vadd.f32 %v749, %v1623
    %v1752 = vadd.f32 %v754, %v1624
    %v1753 = vadd.f32 %v757, %v1625
    %v1754 = vadd.f32 %v762, %v1626
    %v1755 = vadd.f32 %v765, %v1627
    %v1756 = vadd.f32 %v770, %v1628
    %v1757 = vadd.f32 %v773, %v1629
    %v1758 = vadd.f32 %v778, %v1630
    %v1759 = vadd.f32 %v781, %v1631
    %v1760 = vadd.f32 %v786, %v1632
    %v1761 = vadd.f32 %v789, %v1633
    %v1762 = vadd.f32 %v794, %v1634
    %v1763 = vadd.f32 %v797, %v1635
    %v1764 = vadd.f32 %v802, %v1636
    %v1765 = vadd.f32 %v805, %v1637
    %v1766 = vadd.f32 %v810, %v1638
    %v1767 = vadd.f32 %v813, %v1639
    %v1768 = vadd.f32 %v818, %v1640
    %v1769 = vadd.f32 %v821, %v1641
    %v1770 = vadd.f32 %v826, %v1642
    %v1771 = vadd.f32 %v829, %v1643
    %v1772 = vadd.f32 %v834, %v1644
    %v1773 = vadd.f32 %v837, %v1645
    %v1774 = vadd.f32 %v842, %v1646
    %v1775 = vadd.f32 %v845, %v1647
    %v1776 = vadd.f32 %v850, %v1648
    %v1777 = vadd.f32 %v853, %v1649
    %v1778 = vadd.f32 %v858, %v1650
    %v1779 = vadd.f32 %v861, %v1651
    %v1780 = vadd.f32 %v866, %v1652
    %v1781 = vadd.f32 %v869, %v1653
    %v1782 = vadd.f32 %v874, %v1654
    %v1783 = vadd.f32 %v877, %v1655
    %v1784 = vadd.f32 %v882, %v1656
    %v1785 = vadd.f32 %v885, %v1657
    %v1786 = vadd.f32 %v890, %v1658
    %v1787 = vadd.f32 %v893, %v1659
    %v1788 = vadd.f32 %v898, %v1660
    %v1789 = vadd.f32 %v901, %v1661
    %v1790 = vadd.f32 %v906, %v1662
    %v1791 = vadd.f32 %v909, %v1663
    %v1792 = vadd.f32 %v914, %v1664
    %v1793 = vadd.f32 %v917, %v1665
    %v1794 = vadd.f32 %v922, %v1666
    %v1795 = vadd.f32 %v925, %v1667
    %v1796 = vadd.f32 %v930, %v1668
    %v1797 = vadd.f32 %v933, %v1669
    %v1798 = vadd.f32 %v938, %v1670
    %v1799 = vadd.f32 %v941, %v1671
    %v1800 = vadd.f32 %v946, %v1672
    %v1801 = vadd.f32 %v949, %v1673
    %v1802 = vadd.f32 %v954, %v1674
    %v1803 = vadd.f32 %v957, %v1675
    %v1804 = vadd.f32 %v962, %v1676
    %v1805 = vadd.f32 %v965, %v1677
    %v1806 = vadd.f32 %v970, %v1678
    %v1807 = vadd.f32 %v973, %v1679
    %v1808 = vadd.f32 %v978, %v1680
    %v1809 = vadd.f32 %v981, %v1681
    %v1810 = vadd.f32 %v986, %v1682
    %v1811 = vadd.f32 %v989, %v1683
    %v1812 = vadd.f32 %v994, %v1684
    %v1813 = vadd.f32 %v997, %v1685
    %v1814 = vadd.f32 %v1002, %v1686
    %v1815 = vadd.f32 %v1005, %v1687
    %v1816 = vadd.f32 %v1010, %v1688
    %v1817 = vadd.f32 %v1013, %v1689
    %v1818 = vadd.f32 %v1018, %v1690
    %v1819 = vadd.f32 %v1021, %v1691
    %v1820 = vadd.f32 %v1026, %v1692
    %v1821 = vadd.f32 %v1029, %v1693
    %v1822 = vadd.f32 %v1034, %v1694
    %v1823 = vadd.f32 %v1037, %v1695
    %v1824 = vadd.f32 %v1042, %v1696
    %v1825 = vadd.f32 %v1045, %v1697
    %v1826 = vadd.f32 %v1050, %v1698
    %v1827 = vadd.f32 %v1053, %v1699
    %v1828 = vadd.f32 %v1058, %v1700
    %v1829 = vadd.f32 %v1061, %v1701
    %v1830 = vadd.f32 %v1066, %v1702
    %v1831 = vadd.f32 %v1069, %v1703
    %v1832 = vadd.f32 %v1074, %v1704
    %v1833 = vadd.f32 %v1077, %v1705
    %v1834 = vadd.f32 %v1082, %v1706
    %v1835 = vadd.f32 %v1085, %v1707
    %v1836 = vadd.f32 %v1090, %v1708
    %v1837 = vadd.f32 %v1093, %v1709
    %v1838 = vadd.f32 %v1098, %v1710
    %v1839 = vadd.f32 %v1101, %v1711
    %v1840 = vadd.f32 %v1106, %v1712
    %v1841 = vadd.f32 %v1109, %v1713
    %v1842 = vadd.f32 %v1114, %v1714
    %v1843 = vadd.f32 %v1117, %v1715
    %v1844 = vadd.f32 %v1122, %v1716
    %v1845 = vadd.f32 %v1125, %v1717
    %v1846 = vadd.f32 %v1130, %v1718
    %v1847 = vadd.f32 %v1133, %v1719
    %v1848 = vadd.f32 %v1138, %v1720
    %v1849 = vadd.f32 %v1141, %v1721
    %v1850 = vadd.f32 %v1146, %v1722
    %v1851 = vadd.f32 %v1149, %v1723
    %v1852 = vadd.f32 %v1154, %v1724
    %v1853 = vadd.f32 %v1157, %v1725
    %v1854 = vadd.f32 %v1162, %v1726
    %v1855 = vadd.f32 %v1165, %v1727
    %v1856 = vadd.f32 %v1170, %v1728
    %v1857 = vadd.f32 %v1173, %v1729
    %v1858 = vadd.f32 %v1178, %v1730
    %v1859 = vadd.f32 %v1181, %v1731
    %v1860 = vadd.f32 %v1186, %v1732
    %v1861 = vadd.f32 %v1189, %v1733
    %v1862 = vadd.f32 %v1194, %v1734
    %v1863 = vadd.f32 %v1197, %v1735
    %v1864 = vadd.f32 %v1202, %v1736
    %v1865 = vadd.f32 %v1205, %v1737
    %v1866 = vadd.f32 %v1210, %v1738
    %v1867 = vadd.f32 %v1213, %v1739
    %v1868 = vadd.f32 %v1218, %v1740
    %v1869 = vadd.f32 %v1221, %v1741
    %v1870 = vadd.f32 %v1226, %v1742
    %v1871 = vadd.f32 %v1229, %v1743
    %v1872 = vmul.f32 %v1744, 0.7978846
    %v1873 = vmul.f32 %v1745, 0.7978846
    %v1874 = vmul.f32 %v1746, 0.7978846
    %v1875 = vmul.f32 %v1747, 0.7978846
    %v1876 = vmul.f32 %v1748, 0.7978846
    %v1877 = vmul.f32 %v1749, 0.7978846
    %v1878 = vmul.f32 %v1750, 0.7978846
    %v1879 = vmul.f32 %v1751, 0.7978846
    %v1880 = vmul.f32 %v1752, 0.7978846
    %v1881 = vmul.f32 %v1753, 0.7978846
    %v1882 = vmul.f32 %v1754, 0.7978846
    %v1883 = vmul.f32 %v1755, 0.7978846
    %v1884 = vmul.f32 %v1756, 0.7978846
    %v1885 = vmul.f32 %v1757, 0.7978846
    %v1886 = vmul.f32 %v1758, 0.7978846
    %v1887 = vmul.f32 %v1759, 0.7978846
    %v1888 = vmul.f32 %v1760, 0.7978846
    %v1889 = vmul.f32 %v1761, 0.7978846
    %v1890 = vmul.f32 %v1762, 0.7978846
    %v1891 = vmul.f32 %v1763, 0.7978846
    %v1892 = vmul.f32 %v1764, 0.7978846
    %v1893 = vmul.f32 %v1765, 0.7978846
    %v1894 = vmul.f32 %v1766, 0.7978846
    %v1895 = vmul.f32 %v1767, 0.7978846
    %v1896 = vmul.f32 %v1768, 0.7978846
    %v1897 = vmul.f32 %v1769, 0.7978846
    %v1898 = vmul.f32 %v1770, 0.7978846
    %v1899 = vmul.f32 %v1771, 0.7978846
    %v1900 = vmul.f32 %v1772, 0.7978846
    %v1901 = vmul.f32 %v1773, 0.7978846
    %v1902 = vmul.f32 %v1774, 0.7978846
    %v1903 = vmul.f32 %v1775, 0.7978846
    %v1904 = vmul.f32 %v1776, 0.7978846
    %v1905 = vmul.f32 %v1777, 0.7978846
    %v1906 = vmul.f32 %v1778, 0.7978846
    %v1907 = vmul.f32 %v1779, 0.7978846
    %v1908 = vmul.f32 %v1780, 0.7978846
    %v1909 = vmul.f32 %v1781, 0.7978846
    %v1910 = vmul.f32 %v1782, 0.7978846
    %v1911 = vmul.f32 %v1783, 0.7978846
    %v1912 = vmul.f32 %v1784, 0.7978846
    %v1913 = vmul.f32 %v1785, 0.7978846
    %v1914 = vmul.f32 %v1786, 0.7978846
    %v1915 = vmul.f32 %v1787, 0.7978846
    %v1916 = vmul.f32 %v1788, 0.7978846
    %v1917 = vmul.f32 %v1789, 0.7978846
    %v1918 = vmul.f32 %v1790, 0.7978846
    %v1919 = vmul.f32 %v1791, 0.7978846
    %v1920 = vmul.f32 %v1792, 0.7978846
    %v1921 = vmul.f32 %v1793, 0.7978846
    %v1922 = vmul.f32 %v1794, 0.7978846
    %v1923 = vmul.f32 %v1795, 0.7978846
    %v1924 = vmul.f32 %v1796, 0.7978846
    %v1925 = vmul.f32 %v1797, 0.7978846
    %v1926 = vmul.f32 %v1798, 0.7978846
    %v1927 = vmul.f32 %v1799, 0.7978846
    %v1928 = vmul.f32 %v1800, 0.7978846
    %v1929 = vmul.f32 %v1801, 0.7978846
    %v1930 = vmul.f32 %v1802, 0.7978846
    %v1931 = vmul.f32 %v1803, 0.7978846
    %v1932 = vmul.f32 %v1804, 0.7978846
    %v1933 = vmul.f32 %v1805, 0.7978846
    %v1934 = vmul.f32 %v1806, 0.7978846
    %v1935 = vmul.f32 %v1807, 0.7978846
    %v1936 = vmul.f32 %v1808, 0.7978846
    %v1937 = vmul.f32 %v1809, 0.7978846
    %v1938 = vmul.f32 %v1810, 0.7978846
    %v1939 = vmul.f32 %v1811, 0.7978846
    %v1940 = vmul.f32 %v1812, 0.7978846
    %v1941 = vmul.f32 %v1813, 0.7978846
    %v1942 = vmul.f32 %v1814, 0.7978846
    %v1943 = vmul.f32 %v1815, 0.7978846
    %v1944 = vmul.f32 %v1816, 0.7978846
    %v1945 = vmul.f32 %v1817, 0.7978846
    %v1946 = vmul.f32 %v1818, 0.7978846
    %v1947 = vmul.f32 %v1819, 0.7978846
    %v1948 = vmul.f32 %v1820, 0.7978846
    %v1949 = vmul.f32 %v1821, 0.7978846
    %v1950 = vmul.f32 %v1822, 0.7978846
    %v1951 = vmul.f32 %v1823, 0.7978846
    %v1952 = vmul.f32 %v1824, 0.7978846
    %v1953 = vmul.f32 %v1825, 0.7978846
    %v1954 = vmul.f32 %v1826, 0.7978846
    %v1955 = vmul.f32 %v1827, 0.7978846
    %v1956 = vmul.f32 %v1828, 0.7978846
    %v1957 = vmul.f32 %v1829, 0.7978846
    %v1958 = vmul.f32 %v1830, 0.7978846
    %v1959 = vmul.f32 %v1831, 0.7978846
    %v1960 = vmul.f32 %v1832, 0.7978846
    %v1961 = vmul.f32 %v1833, 0.7978846
    %v1962 = vmul.f32 %v1834, 0.7978846
    %v1963 = vmul.f32 %v1835, 0.7978846
    %v1964 = vmul.f32 %v1836, 0.7978846
    %v1965 = vmul.f32 %v1837, 0.7978846
    %v1966 = vmul.f32 %v1838, 0.7978846
    %v1967 = vmul.f32 %v1839, 0.7978846
    %v1968 = vmul.f32 %v1840, 0.7978846
    %v1969 = vmul.f32 %v1841, 0.7978846
    %v1970 = vmul.f32 %v1842, 0.7978846
    %v1971 = vmul.f32 %v1843, 0.7978846
    %v1972 = vmul.f32 %v1844, 0.7978846
    %v1973 = vmul.f32 %v1845, 0.7978846
    %v1974 = vmul.f32 %v1846, 0.7978846
    %v1975 = vmul.f32 %v1847, 0.7978846
    %v1976 = vmul.f32 %v1848, 0.7978846
    %v1977 = vmul.f32 %v1849, 0.7978846
    %v1978 = vmul.f32 %v1850, 0.7978846
    %v1979 = vmul.f32 %v1851, 0.7978846
    %v1980 = vmul.f32 %v1852, 0.7978846
    %v1981 = vmul.f32 %v1853, 0.7978846
    %v1982 = vmul.f32 %v1854, 0.7978846
    %v1983 = vmul.f32 %v1855, 0.7978846
    %v1984 = vmul.f32 %v1856, 0.7978846
    %v1985 = vmul.f32 %v1857, 0.7978846
    %v1986 = vmul.f32 %v1858, 0.7978846
    %v1987 = vmul.f32 %v1859, 0.7978846
    %v1988 = vmul.f32 %v1860, 0.7978846
    %v1989 = vmul.f32 %v1861, 0.7978846
    %v1990 = vmul.f32 %v1862, 0.7978846
    %v1991 = vmul.f32 %v1863, 0.7978846
    %v1992 = vmul.f32 %v1864, 0.7978846
    %v1993 = vmul.f32 %v1865, 0.7978846
    %v1994 = vmul.f32 %v1866, 0.7978846
    %v1995 = vmul.f32 %v1867, 0.7978846
    %v1996 = vmul.f32 %v1868, 0.7978846
    %v1997 = vmul.f32 %v1869, 0.7978846
    %v1998 = vmul.f32 %v1870, 0.7978846
    %v1999 = vmul.f32 %v1871, 0.7978846
    %v2000 = vtanh.pop %v1872
    %v2001 = vtanh.pop %v1873
    %v2002 = vtanh.pop %v1874
    %v2003 = vtanh.pop %v1875
    %v2004 = vtanh.pop %v1876
    %v2005 = vtanh.pop %v1877
    %v2006 = vtanh.pop %v1878
    %v2007 = vtanh.pop %v1879
    %v2008 = vtanh.pop %v1880
    %v2009 = vtanh.pop %v1881
    %v2010 = vtanh.pop %v1882
    %v2011 = vtanh.pop %v1883
    %v2012 = vtanh.pop %v1884
    %v2013 = vtanh.pop %v1885
    %v2014 = vtanh.pop %v1886
    %v2015 = vtanh.pop %v1887
    %v2016 = vtanh.pop %v1888
    %v2017 = vtanh.pop %v1889
    %v2018 = vtanh.pop %v1890
    %v2019 = vtanh.pop %v1891
    %v2020 = vtanh.pop %v1892
    %v2021 = vtanh.pop %v1893
    %v2022 = vtanh.pop %v1894
    %v2023 = vtanh.pop %v1895
    %v2024 = vtanh.pop %v1896
    %v2025 = vtanh.pop %v1897
    %v2026 = vtanh.pop %v1898
    %v2027 = vtanh.pop %v1899
    %v2028 = vtanh.pop %v1900
    %v2029 = vtanh.pop %v1901
    %v2030 = vtanh.pop %v1902
    %v2031 = vtanh.pop %v1903
    %v2032 = vtanh.pop %v1904
    %v2033 = vtanh.pop %v1905
    %v2034 = vtanh.pop %v1906
    %v2035 = vtanh.pop %v1907
    %v2036 = vtanh.pop %v1908
    %v2037 = vtanh.pop %v1909
    %v2038 = vtanh.pop %v1910
    %v2039 = vtanh.pop %v1911
    %v2040 = vtanh.pop %v1912
    %v2041 = vtanh.pop %v1913
    %v2042 = vtanh.pop %v1914
    %v2043 = vtanh.pop %v1915
    %v2044 = vtanh.pop %v1916
    %v2045 = vtanh.pop %v1917
    %v2046 = vtanh.pop %v1918
    %v2047 = vtanh.pop %v1919
    %v2048 = vtanh.pop %v1920
    %v2049 = vtanh.pop %v1921
    %v2050 = vtanh.pop %v1922
    %v2051 = vtanh.pop %v1923
    %v2052 = vtanh.pop %v1924
    %v2053 = vtanh.pop %v1925
    %v2054 = vtanh.pop %v1926
    %v2055 = vtanh.pop %v1927
    %v2056 = vtanh.pop %v1928
    %v2057 = vtanh.pop %v1929
    %v2058 = vtanh.pop %v1930
    %v2059 = vtanh.pop %v1931
    %v2060 = vtanh.pop %v1932
    %v2061 = vtanh.pop %v1933
    %v2062 = vtanh.pop %v1934
    %v2063 = vtanh.pop %v1935
    %v2064 = vtanh.pop %v1936
    %v2065 = vtanh.pop %v1937
    %v2066 = vtanh.pop %v1938
    %v2067 = vtanh.pop %v1939
    %v2068 = vtanh.pop %v1940
    %v2069 = vtanh.pop %v1941
    %v2070 = vtanh.pop %v1942
    %v2071 = vtanh.pop %v1943
    %v2072 = vtanh.pop %v1944
    %v2073 = vtanh.pop %v1945
    %v2074 = vtanh.pop %v1946
    %v2075 = vtanh.pop %v1947
    %v2076 = vtanh.pop %v1948
    %v2077 = vtanh.pop %v1949
    %v2078 = vtanh.pop %v1950
    %v2079 = vtanh.pop %v1951
    %v2080 = vtanh.pop %v1952
    %v2081 = vtanh.pop %v1953
    %v2082 = vtanh.pop %v1954
    %v2083 = vtanh.pop %v1955
    %v2084 = vtanh.pop %v1956
    %v2085 = vtanh.pop %v1957
    %v2086 = vtanh.pop %v1958
    %v2087 = vtanh.pop %v1959
    %v2088 = vtanh.pop %v1960
    %v2089 = vtanh.pop %v1961
    %v2090 = vtanh.pop %v1962
    %v2091 = vtanh.pop %v1963
    %v2092 = vtanh.pop %v1964
    %v2093 = vtanh.pop %v1965
    %v2094 = vtanh.pop %v1966
    %v2095 = vtanh.pop %v1967
    %v2096 = vtanh.pop %v1968
    %v2097 = vtanh.pop %v1969
    %v2098 = vtanh.pop %v1970
    %v2099 = vtanh.pop %v1971
    %v2100 = vtanh.pop %v1972
    %v2101 = vtanh.pop %v1973
    %v2102 = vtanh.pop %v1974
    %v2103 = vtanh.pop %v1975
    %v2104 = vtanh.pop %v1976
    %v2105 = vtanh.pop %v1977
    %v2106 = vtanh.pop %v1978
    %v2107 = vtanh.pop %v1979
    %v2108 = vtanh.pop %v1980
    %v2109 = vtanh.pop %v1981
    %v2110 = vtanh.pop %v1982
    %v2111 = vtanh.pop %v1983
    %v2112 = vtanh.pop %v1984
    %v2113 = vtanh.pop %v1985
    %v2114 = vtanh.pop %v1986
    %v2115 = vtanh.pop %v1987
    %v2116 = vtanh.pop %v1988
    %v2117 = vtanh.pop %v1989
    %v2118 = vtanh.pop %v1990
    %v2119 = vtanh.pop %v1991
    %v2120 = vtanh.pop %v1992
    %v2121 = vtanh.pop %v1993
    %v2122 = vtanh.pop %v1994
    %v2123 = vtanh.pop %v1995
    %v2124 = vtanh.pop %v1996
    %v2125 = vtanh.pop %v1997
    %v2126 = vtanh.pop %v1998
    %v2127 = vtanh.pop %v1999
    %v2128 = vadd.f32 %v2000, 1.0
    %v2129 = vadd.f32 %v2001, 1.0
    %v2130 = vadd.f32 %v2002, 1.0
    %v2131 = vadd.f32 %v2003, 1.0
    %v2132 = vadd.f32 %v2004, 1.0
    %v2133 = vadd.f32 %v2005, 1.0
    %v2134 = vadd.f32 %v2006, 1.0
    %v2135 = vadd.f32 %v2007, 1.0
    %v2136 = vadd.f32 %v2008, 1.0
    %v2137 = vadd.f32 %v2009, 1.0
    %v2138 = vadd.f32 %v2010, 1.0
    %v2139 = vadd.f32 %v2011, 1.0
    %v2140 = vadd.f32 %v2012, 1.0
    %v2141 = vadd.f32 %v2013, 1.0
    %v2142 = vadd.f32 %v2014, 1.0
    %v2143 = vadd.f32 %v2015, 1.0
    %v2144 = vadd.f32 %v2016, 1.0
    %v2145 = vadd.f32 %v2017, 1.0
    %v2146 = vadd.f32 %v2018, 1.0
    %v2147 = vadd.f32 %v2019, 1.0
    %v2148 = vadd.f32 %v2020, 1.0
    %v2149 = vadd.f32 %v2021, 1.0
    %v2150 = vadd.f32 %v2022, 1.0
    %v2151 = vadd.f32 %v2023, 1.0
    %v2152 = vadd.f32 %v2024, 1.0
    %v2153 = vadd.f32 %v2025, 1.0
    %v2154 = vadd.f32 %v2026, 1.0
    %v2155 = vadd.f32 %v2027, 1.0
    %v2156 = vadd.f32 %v2028, 1.0
    %v2157 = vadd.f32 %v2029, 1.0
    %v2158 = vadd.f32 %v2030, 1.0
    %v2159 = vadd.f32 %v2031, 1.0
    %v2160 = vadd.f32 %v2032, 1.0
    %v2161 = vadd.f32 %v2033, 1.0
    %v2162 = vadd.f32 %v2034, 1.0
    %v2163 = vadd.f32 %v2035, 1.0
    %v2164 = vadd.f32 %v2036, 1.0
    %v2165 = vadd.f32 %v2037, 1.0
    %v2166 = vadd.f32 %v2038, 1.0
    %v2167 = vadd.f32 %v2039, 1.0
    %v2168 = vadd.f32 %v2040, 1.0
    %v2169 = vadd.f32 %v2041, 1.0
    %v2170 = vadd.f32 %v2042, 1.0
    %v2171 = vadd.f32 %v2043, 1.0
    %v2172 = vadd.f32 %v2044, 1.0
    %v2173 = vadd.f32 %v2045, 1.0
    %v2174 = vadd.f32 %v2046, 1.0
    %v2175 = vadd.f32 %v2047, 1.0
    %v2176 = vadd.f32 %v2048, 1.0
    %v2177 = vadd.f32 %v2049, 1.0
    %v2178 = vadd.f32 %v2050, 1.0
    %v2179 = vadd.f32 %v2051, 1.0
    %v2180 = vadd.f32 %v2052, 1.0
    %v2181 = vadd.f32 %v2053, 1.0
    %v2182 = vadd.f32 %v2054, 1.0
    %v2183 = vadd.f32 %v2055, 1.0
    %v2184 = vadd.f32 %v2056, 1.0
    %v2185 = vadd.f32 %v2057, 1.0
    %v2186 = vadd.f32 %v2058, 1.0
    %v2187 = vadd.f32 %v2059, 1.0
    %v2188 = vadd.f32 %v2060, 1.0
    %v2189 = vadd.f32 %v2061, 1.0
    %v2190 = vadd.f32 %v2062, 1.0
    %v2191 = vadd.f32 %v2063, 1.0
    %v2192 = vadd.f32 %v2064, 1.0
    %v2193 = vadd.f32 %v2065, 1.0
    %v2194 = vadd.f32 %v2066, 1.0
    %v2195 = vadd.f32 %v2067, 1.0
    %v2196 = vadd.f32 %v2068, 1.0
    %v2197 = vadd.f32 %v2069, 1.0
    %v2198 = vadd.f32 %v2070, 1.0
    %v2199 = vadd.f32 %v2071, 1.0
    %v2200 = vadd.f32 %v2072, 1.0
    %v2201 = vadd.f32 %v2073, 1.0
    %v2202 = vadd.f32 %v2074, 1.0
    %v2203 = vadd.f32 %v2075, 1.0
    %v2204 = vadd.f32 %v2076, 1.0
    %v2205 = vadd.f32 %v2077, 1.0
    %v2206 = vadd.f32 %v2078, 1.0
    %v2207 = vadd.f32 %v2079, 1.0
    %v2208 = vadd.f32 %v2080, 1.0
    %v2209 = vadd.f32 %v2081, 1.0
    %v2210 = vadd.f32 %v2082, 1.0
    %v2211 = vadd.f32 %v2083, 1.0
    %v2212 = vadd.f32 %v2084, 1.0
    %v2213 = vadd.f32 %v2085, 1.0
    %v2214 = vadd.f32 %v2086, 1.0
    %v2215 = vadd.f32 %v2087, 1.0
    %v2216 = vadd.f32 %v2088, 1.0
    %v2217 = vadd.f32 %v2089, 1.0
    %v2218 = vadd.f32 %v2090, 1.0
    %v2219 = vadd.f32 %v2091, 1.0
    %v2220 = vadd.f32 %v2092, 1.0
    %v2221 = vadd.f32 %v2093, 1.0
    %v2222 = vadd.f32 %v2094, 1.0
    %v2223 = vadd.f32 %v2095, 1.0
    %v2224 = vadd.f32 %v2096, 1.0
    %v2225 = vadd.f32 %v2097, 1.0
    %v2226 = vadd.f32 %v2098, 1.0
    %v2227 = vadd.f32 %v2099, 1.0
    %v2228 = vadd.f32 %v2100, 1.0
    %v2229 = vadd.f32 %v2101, 1.0
    %v2230 = vadd.f32 %v2102, 1.0
    %v2231 = vadd.f32 %v2103, 1.0
    %v2232 = vadd.f32 %v2104, 1.0
    %v2233 = vadd.f32 %v2105, 1.0
    %v2234 = vadd.f32 %v2106, 1.0
    %v2235 = vadd.f32 %v2107, 1.0
    %v2236 = vadd.f32 %v2108, 1.0
    %v2237 = vadd.f32 %v2109, 1.0
    %v2238 = vadd.f32 %v2110, 1.0
    %v2239 = vadd.f32 %v2111, 1.0
    %v2240 = vadd.f32 %v2112, 1.0
    %v2241 = vadd.f32 %v2113, 1.0
    %v2242 = vadd.f32 %v2114, 1.0
    %v2243 = vadd.f32 %v2115, 1.0
    %v2244 = vadd.f32 %v2116, 1.0
    %v2245 = vadd.f32 %v2117, 1.0
    %v2246 = vadd.f32 %v2118, 1.0
    %v2247 = vadd.f32 %v2119, 1.0
    %v2248 = vadd.f32 %v2120, 1.0
    %v2249 = vadd.f32 %v2121, 1.0
    %v2250 = vadd.f32 %v2122, 1.0
    %v2251 = vadd.f32 %v2123, 1.0
    %v2252 = vadd.f32 %v2124, 1.0
    %v2253 = vadd.f32 %v2125, 1.0
    %v2254 = vadd.f32 %v2126, 1.0
    %v2255 = vadd.f32 %v2127, 1.0
    %v2256 = vmul.f32 %v1232, %v2128
    %v2257 = vmul.f32 %v1233, %v2129
    %v2258 = vmul.f32 %v1234, %v2130
    %v2259 = vmul.f32 %v1235, %v2131
    %v2260 = vmul.f32 %v1236, %v2132
    %v2261 = vmul.f32 %v1237, %v2133
    %v2262 = vmul.f32 %v1238, %v2134
    %v2263 = vmul.f32 %v1239, %v2135
    %v2264 = vmul.f32 %v1240, %v2136
    %v2265 = vmul.f32 %v1241, %v2137
    %v2266 = vmul.f32 %v1242, %v2138
    %v2267 = vmul.f32 %v1243, %v2139
    %v2268 = vmul.f32 %v1244, %v2140
    %v2269 = vmul.f32 %v1245, %v2141
    %v2270 = vmul.f32 %v1246, %v2142
    %v2271 = vmul.f32 %v1247, %v2143
    %v2272 = vmul.f32 %v1248, %v2144
    %v2273 = vmul.f32 %v1249, %v2145
    %v2274 = vmul.f32 %v1250, %v2146
    %v2275 = vmul.f32 %v1251, %v2147
    %v2276 = vmul.f32 %v1252, %v2148
    %v2277 = vmul.f32 %v1253, %v2149
    %v2278 = vmul.f32 %v1254, %v2150
    %v2279 = vmul.f32 %v1255, %v2151
    %v2280 = vmul.f32 %v1256, %v2152
    %v2281 = vmul.f32 %v1257, %v2153
    %v2282 = vmul.f32 %v1258, %v2154
    %v2283 = vmul.f32 %v1259, %v2155
    %v2284 = vmul.f32 %v1260, %v2156
    %v2285 = vmul.f32 %v1261, %v2157
    %v2286 = vmul.f32 %v1262, %v2158
    %v2287 = vmul.f32 %v1263, %v2159
    %v2288 = vmul.f32 %v1264, %v2160
    %v2289 = vmul.f32 %v1265, %v2161
    %v2290 = vmul.f32 %v1266, %v2162
    %v2291 = vmul.f32 %v1267, %v2163
    %v2292 = vmul.f32 %v1268, %v2164
    %v2293 = vmul.f32 %v1269, %v2165
    %v2294 = vmul.f32 %v1270, %v2166
    %v2295 = vmul.f32 %v1271, %v2167
    %v2296 = vmul.f32 %v1272, %v2168
    %v2297 = vmul.f32 %v1273, %v2169
    %v2298 = vmul.f32 %v1274, %v2170
    %v2299 = vmul.f32 %v1275, %v2171
    %v2300 = vmul.f32 %v1276, %v2172
    %v2301 = vmul.f32 %v1277, %v2173
    %v2302 = vmul.f32 %v1278, %v2174
    %v2303 = vmul.f32 %v1279, %v2175
    %v2304 = vmul.f32 %v1280, %v2176
    %v2305 = vmul.f32 %v1281, %v2177
    %v2306 = vmul.f32 %v1282, %v2178
    %v2307 = vmul.f32 %v1283, %v2179
    %v2308 = vmul.f32 %v1284, %v2180
    %v2309 = vmul.f32 %v1285, %v2181
    %v2310 = vmul.f32 %v1286, %v2182
    %v2311 = vmul.f32 %v1287, %v2183
    %v2312 = vmul.f32 %v1288, %v2184
    %v2313 = vmul.f32 %v1289, %v2185
    %v2314 = vmul.f32 %v1290, %v2186
    %v2315 = vmul.f32 %v1291, %v2187
    %v2316 = vmul.f32 %v1292, %v2188
    %v2317 = vmul.f32 %v1293, %v2189
    %v2318 = vmul.f32 %v1294, %v2190
    %v2319 = vmul.f32 %v1295, %v2191
    %v2320 = vmul.f32 %v1296, %v2192
    %v2321 = vmul.f32 %v1297, %v2193
    %v2322 = vmul.f32 %v1298, %v2194
    %v2323 = vmul.f32 %v1299, %v2195
    %v2324 = vmul.f32 %v1300, %v2196
    %v2325 = vmul.f32 %v1301, %v2197
    %v2326 = vmul.f32 %v1302, %v2198
    %v2327 = vmul.f32 %v1303, %v2199
    %v2328 = vmul.f32 %v1304, %v2200
    %v2329 = vmul.f32 %v1305, %v2201
    %v2330 = vmul.f32 %v1306, %v2202
    %v2331 = vmul.f32 %v1307, %v2203
    %v2332 = vmul.f32 %v1308, %v2204
    %v2333 = vmul.f32 %v1309, %v2205
    %v2334 = vmul.f32 %v1310, %v2206
    %v2335 = vmul.f32 %v1311, %v2207
    %v2336 = vmul.f32 %v1312, %v2208
    %v2337 = vmul.f32 %v1313, %v2209
    %v2338 = vmul.f32 %v1314, %v2210
    %v2339 = vmul.f32 %v1315, %v2211
    %v2340 = vmul.f32 %v1316, %v2212
    %v2341 = vmul.f32 %v1317, %v2213
    %v2342 = vmul.f32 %v1318, %v2214
    %v2343 = vmul.f32 %v1319, %v2215
    %v2344 = vmul.f32 %v1320, %v2216
    %v2345 = vmul.f32 %v1321, %v2217
    %v2346 = vmul.f32 %v1322, %v2218
    %v2347 = vmul.f32 %v1323, %v2219
    %v2348 = vmul.f32 %v1324, %v2220
    %v2349 = vmul.f32 %v1325, %v2221
    %v2350 = vmul.f32 %v1326, %v2222
    %v2351 = vmul.f32 %v1327, %v2223
    %v2352 = vmul.f32 %v1328, %v2224
    %v2353 = vmul.f32 %v1329, %v2225
    %v2354 = vmul.f32 %v1330, %v2226
    %v2355 = vmul.f32 %v1331, %v2227
    %v2356 = vmul.f32 %v1332, %v2228
    %v2357 = vmul.f32 %v1333, %v2229
    %v2358 = vmul.f32 %v1334, %v2230
    %v2359 = vmul.f32 %v1335, %v2231
    %v2360 = vmul.f32 %v1336, %v2232
    %v2361 = vmul.f32 %v1337, %v2233
    %v2362 = vmul.f32 %v1338, %v2234
    %v2363 = vmul.f32 %v1339, %v2235
    %v2364 = vmul.f32 %v1340, %v2236
    %v2365 = vmul.f32 %v1341, %v2237
    %v2366 = vmul.f32 %v1342, %v2238
    %v2367 = vmul.f32 %v1343, %v2239
    %v2368 = vmul.f32 %v1344, %v2240
    %v2369 = vmul.f32 %v1345, %v2241
    %v2370 = vmul.f32 %v1346, %v2242
    %v2371 = vmul.f32 %v1347, %v2243
    %v2372 = vmul.f32 %v1348, %v2244
    %v2373 = vmul.f32 %v1349, %v2245
    %v2374 = vmul.f32 %v1350, %v2246
    %v2375 = vmul.f32 %v1351, %v2247
    %v2376 = vmul.f32 %v1352, %v2248
    %v2377 = vmul.f32 %v1353, %v2249
    %v2378 = vmul.f32 %v1354, %v2250
    %v2379 = vmul.f32 %v1355, %v2251
    %v2380 = vmul.f32 %v1356, %v2252
    %v2381 = vmul.f32 %v1357, %v2253
    %v2382 = vmul.f32 %v1358, %v2254
    %v2383 = vmul.f32 %v1359, %v2255
    %v2384 = vadd.f32 %v2256, %v2272
    %v2385 = vadd.f32 %v2257, %v2273
    %v2386 = vadd.f32 %v2258, %v2274
    %v2387 = vadd.f32 %v2259, %v2275
    %v2388 = vadd.f32 %v2260, %v2276
    %v2389 = vadd.f32 %v2261, %v2277
    %v2390 = vadd.f32 %v2262, %v2278
    %v2391 = vadd.f32 %v2263, %v2279
    %v2392 = vadd.f32 %v2264, %v2280
    %v2393 = vadd.f32 %v2265, %v2281
    %v2394 = vadd.f32 %v2266, %v2282
    %v2395 = vadd.f32 %v2267, %v2283
    %v2396 = vadd.f32 %v2268, %v2284
    %v2397 = vadd.f32 %v2269, %v2285
    %v2398 = vadd.f32 %v2270, %v2286
    %v2399 = vadd.f32 %v2271, %v2287
    %v2400 = vadd.f32 %v2384, %v2288
    %v2401 = vadd.f32 %v2385, %v2289
    %v2402 = vadd.f32 %v2386, %v2290
    %v2403 = vadd.f32 %v2387, %v2291
    %v2404 = vadd.f32 %v2388, %v2292
    %v2405 = vadd.f32 %v2389, %v2293
    %v2406 = vadd.f32 %v2390, %v2294
    %v2407 = vadd.f32 %v2391, %v2295
    %v2408 = vadd.f32 %v2392, %v2296
    %v2409 = vadd.f32 %v2393, %v2297
    %v2410 = vadd.f32 %v2394, %v2298
    %v2411 = vadd.f32 %v2395, %v2299
    %v2412 = vadd.f32 %v2396, %v2300
    %v2413 = vadd.f32 %v2397, %v2301
    %v2414 = vadd.f32 %v2398, %v2302
    %v2415 = vadd.f32 %v2399, %v2303
    %v2416 = vadd.f32 %v2400, %v2304
    %v2417 = vadd.f32 %v2401, %v2305
    %v2418 = vadd.f32 %v2402, %v2306
    %v2419 = vadd.f32 %v2403, %v2307
    %v2420 = vadd.f32 %v2404, %v2308
    %v2421 = vadd.f32 %v2405, %v2309
    %v2422 = vadd.f32 %v2406, %v2310
    %v2423 = vadd.f32 %v2407, %v2311
    %v2424 = vadd.f32 %v2408, %v2312
    %v2425 = vadd.f32 %v2409, %v2313
    %v2426 = vadd.f32 %v2410, %v2314
    %v2427 = vadd.f32 %v2411, %v2315
    %v2428 = vadd.f32 %v2412, %v2316
    %v2429 = vadd.f32 %v2413, %v2317
    %v2430 = vadd.f32 %v2414, %v2318
    %v2431 = vadd.f32 %v2415, %v2319
    %v2432 = vadd.f32 %v2416, %v2320
    %v2433 = vadd.f32 %v2417, %v2321
    %v2434 = vadd.f32 %v2418, %v2322
    %v2435 = vadd.f32 %v2419, %v2323
    %v2436 = vadd.f32 %v2420, %v2324
    %v2437 = vadd.f32 %v2421, %v2325
    %v2438 = vadd.f32 %v2422, %v2326
    %v2439 = vadd.f32 %v2423, %v2327
    %v2440 = vadd.f32 %v2424, %v2328
    %v2441 = vadd.f32 %v2425, %v2329
    %v2442 = vadd.f32 %v2426, %v2330
    %v2443 = vadd.f32 %v2427, %v2331
    %v2444 = vadd.f32 %v2428, %v2332
    %v2445 = vadd.f32 %v2429, %v2333
    %v2446 = vadd.f32 %v2430, %v2334
    %v2447 = vadd.f32 %v2431, %v2335
    %v2448 = vadd.f32 %v2432, %v2336
    %v2449 = vadd.f32 %v2433, %v2337
    %v2450 = vadd.f32 %v2434, %v2338
    %v2451 = vadd.f32 %v2435, %v2339
    %v2452 = vadd.f32 %v2436, %v2340
    %v2453 = vadd.f32 %v2437, %v2341
    %v2454 = vadd.f32 %v2438, %v2342
    %v2455 = vadd.f32 %v2439, %v2343
    %v2456 = vadd.f32 %v2440, %v2344
    %v2457 = vadd.f32 %v2441, %v2345
    %v2458 = vadd.f32 %v2442, %v2346
    %v2459 = vadd.f32 %v2443, %v2347
    %v2460 = vadd.f32 %v2444, %v2348
    %v2461 = vadd.f32 %v2445, %v2349
    %v2462 = vadd.f32 %v2446, %v2350
    %v2463 = vadd.f32 %v2447, %v2351
    %v2464 = vadd.f32 %v2448, %v2352
    %v2465 = vadd.f32 %v2449, %v2353
    %v2466 = vadd.f32 %v2450, %v2354
    %v2467 = vadd.f32 %v2451, %v2355
    %v2468 = vadd.f32 %v2452, %v2356
    %v2469 = vadd.f32 %v2453, %v2357
    %v2470 = vadd.f32 %v2454, %v2358
    %v2471 = vadd.f32 %v2455, %v2359
    %v2472 = vadd.f32 %v2456, %v2360
    %v2473 = vadd.f32 %v2457, %v2361
    %v2474 = vadd.f32 %v2458, %v2362
    %v2475 = vadd.f32 %v2459, %v2363
    %v2476 = vadd.f32 %v2460, %v2364
    %v2477 = vadd.f32 %v2461, %v2365
    %v2478 = vadd.f32 %v2462, %v2366
    %v2479 = vadd.f32 %v2463, %v2367
    %v2480 = vadd.f32 %v2464, %v2368
    %v2481 = vadd.f32 %v2465, %v2369
    %v2482 = vadd.f32 %v2466, %v2370
    %v2483 = vadd.f32 %v2467, %v2371
    %v2484 = vadd.f32 %v2468, %v2372
    %v2485 = vadd.f32 %v2469, %v2373
    %v2486 = vadd.f32 %v2470, %v2374
    %v2487 = vadd.f32 %v2471, %v2375
    %v2488 = vadd.f32 %v2472, %v2376
    %v2489 = vadd.f32 %v2473, %v2377
    %v2490 = vadd.f32 %v2474, %v2378
    %v2491 = vadd.f32 %v2475, %v2379
    %v2492 = vadd.f32 %v2476, %v2380
    %v2493 = vadd.f32 %v2477, %v2381
    %v2494 = vadd.f32 %v2478, %v2382
    %v2495 = vadd.f32 %v2479, %v2383
    %v2496 = vmul.f32 %v2480, 0.125
    %v2497 = vmul.f32 %v2481, 0.125
    %v2498 = vmul.f32 %v2482, 0.125
    %v2499 = vmul.f32 %v2483, 0.125
    %v2500 = vmul.f32 %v2484, 0.125
    %v2501 = vmul.f32 %v2485, 0.125
    %v2502 = vmul.f32 %v2486, 0.125
    %v2503 = vmul.f32 %v2487, 0.125
    %v2504 = vmul.f32 %v2488, 0.125
    %v2505 = vmul.f32 %v2489, 0.125
    %v2506 = vmul.f32 %v2490, 0.125
    %v2507 = vmul.f32 %v2491, 0.125
    %v2508 = vmul.f32 %v2492, 0.125
    %v2509 = vmul.f32 %v2493, 0.125
    %v2510 = vmul.f32 %v2494, 0.125
    %v2511 = vmul.f32 %v2495, 0.125
    %v2512 = vld [vmem:[%s3] sm:$0x1]
    %v2514 = vlaneseq
    %v2515 = vshrl.u32 %v2514, 7
    %v2516 = vsub.s32 0, %v2515
    %v2517 = vrot.slane %v2512, %v2516
    %v2519 = vmul.f32 %v2496, %v2517
    %v2520 = vmul.f32 %v2497, %v2517
    %v2521 = vmul.f32 %v2498, %v2517
    %v2522 = vmul.f32 %v2499, %v2517
    %v2523 = vmul.f32 %v2500, %v2517
    %v2524 = vmul.f32 %v2501, %v2517
    %v2525 = vmul.f32 %v2502, %v2517
    %v2526 = vmul.f32 %v2503, %v2517
    %v2527 = vmul.f32 %v2504, %v2517
    %v2528 = vmul.f32 %v2505, %v2517
    %v2529 = vmul.f32 %v2506, %v2517
    %v2530 = vmul.f32 %v2507, %v2517
    %v2531 = vmul.f32 %v2508, %v2517
    %v2532 = vmul.f32 %v2509, %v2517
    %v2533 = vmul.f32 %v2510, %v2517
    %v2534 = vmul.f32 %v2511, %v2517
    %v2535 = vsel %vm494, %v2519, 0.0
    %2536 = vadd.xlane.f32.xlu0 %v2535
    %v2537 = vpop.xlane.xlu0 %2536
    %v2538 = vsel %vm494, %v2520, 0.0
    %2539 = vadd.xlane.f32.xlu0 %v2538
    %v2540 = vpop.xlane.xlu0 %2539
    %v2541 = vsel %vm494, %v2521, 0.0
    %2542 = vadd.xlane.f32.xlu0 %v2541
    %v2543 = vpop.xlane.xlu0 %2542
    %v2544 = vsel %vm494, %v2522, 0.0
    %2545 = vadd.xlane.f32.xlu0 %v2544
    %v2546 = vpop.xlane.xlu0 %2545
    %v2547 = vsel %vm494, %v2523, 0.0
    %2548 = vadd.xlane.f32.xlu0 %v2547
    %v2549 = vpop.xlane.xlu0 %2548
    %v2550 = vsel %vm494, %v2524, 0.0
    %2551 = vadd.xlane.f32.xlu0 %v2550
    %v2552 = vpop.xlane.xlu0 %2551
    %v2553 = vsel %vm494, %v2525, 0.0
    %2554 = vadd.xlane.f32.xlu0 %v2553
    %v2555 = vpop.xlane.xlu0 %2554
    %v2556 = vsel %vm494, %v2526, 0.0
    %2557 = vadd.xlane.f32.xlu0 %v2556
    %v2558 = vpop.xlane.xlu0 %2557
    %v2559 = vsel %vm494, %v2527, 0.0
    %2560 = vadd.xlane.f32.xlu0 %v2559
    %v2561 = vpop.xlane.xlu0 %2560
    %v2562 = vsel %vm494, %v2528, 0.0
    %2563 = vadd.xlane.f32.xlu0 %v2562
    %v2564 = vpop.xlane.xlu0 %2563
    %v2565 = vsel %vm494, %v2529, 0.0
    %2566 = vadd.xlane.f32.xlu0 %v2565
    %v2567 = vpop.xlane.xlu0 %2566
    %v2568 = vsel %vm494, %v2530, 0.0
    %2569 = vadd.xlane.f32.xlu0 %v2568
    %v2570 = vpop.xlane.xlu0 %2569
    %v2571 = vsel %vm494, %v2531, 0.0
    %2572 = vadd.xlane.f32.xlu0 %v2571
    %v2573 = vpop.xlane.xlu0 %2572
    %v2574 = vsel %vm494, %v2532, 0.0
    %2575 = vadd.xlane.f32.xlu0 %v2574
    %v2576 = vpop.xlane.xlu0 %2575
    %v2577 = vsel %vm494, %v2533, 0.0
    %2578 = vadd.xlane.f32.xlu0 %v2577
    %v2579 = vpop.xlane.xlu0 %2578
    %v2580 = vsel %vm494, %v2534, 0.0
    %2581 = vadd.xlane.f32.xlu0 %v2580
    %v2582 = vpop.xlane.xlu0 %2581
    %s2583 = sld [smem:[#allocation2]]
    %v2584 = vstv %s2583
    %v2585 = vadd.f32 %v2537, %v2584
    %v2586 = vadd.f32 %v2540, %v2584
    %v2587 = vadd.f32 %v2543, %v2584
    %v2588 = vadd.f32 %v2546, %v2584
    %v2589 = vadd.f32 %v2549, %v2584
    %v2590 = vadd.f32 %v2552, %v2584
    %v2591 = vadd.f32 %v2555, %v2584
    %v2592 = vadd.f32 %v2558, %v2584
    %v2593 = vadd.f32 %v2561, %v2584
    %v2594 = vadd.f32 %v2564, %v2584
    %v2595 = vadd.f32 %v2567, %v2584
    %v2596 = vadd.f32 %v2570, %v2584
    %v2597 = vadd.f32 %v2573, %v2584
    %v2598 = vadd.f32 %v2576, %v2584
    %v2599 = vadd.f32 %v2579, %v2584
    %v2600 = vadd.f32 %v2582, %v2584
    %v2617 = vlaneseq
    %v2618 = vand.u32 %v2617, 127
    %v2619 = vlaneseq
    %v2620 = vshrl.u32 %v2619, 7
    %v2621 = vsub.s32 %v2618, %v2620
    %v2622 = vrot.slane %v2585, %v2621
    %v2623 = vadd.s32 %v2618, 4294967288
    %v2624 = vlaneseq
    %v2625 = vshrl.u32 %v2624, 7
    %v2626 = vsub.s32 %v2623, %v2625
    %v2627 = vrot.slane %v2586, %v2626
    %vm2628 = vcmask 130112
    %v2629 = vsel %vm2628, %v2627, %v2622
    %v2630 = vadd.s32 %v2618, 4294967280
    %v2631 = vlaneseq
    %v2632 = vshrl.u32 %v2631, 7
    %v2633 = vsub.s32 %v2630, %v2632
    %v2634 = vrot.slane %v2587, %v2633
    %vm2635 = vcmask 195712
    %v2636 = vsel %vm2635, %v2634, %v2629
    %v2637 = vadd.s32 %v2618, 4294967272
    %v2638 = vlaneseq
    %v2639 = vshrl.u32 %v2638, 7
    %v2640 = vsub.s32 %v2637, %v2639
    %v2641 = vrot.slane %v2588, %v2640
    %vm2642 = vcmask 261312
    %v2643 = vsel %vm2642, %v2641, %v2636
    %v2644 = vadd.s32 %v2618, 4294967264
    %v2645 = vlaneseq
    %v2646 = vshrl.u32 %v2645, 7
    %v2647 = vsub.s32 %v2644, %v2646
    %v2648 = vrot.slane %v2589, %v2647
    %vm2649 = vcmask 326912
    %v2650 = vsel %vm2649, %v2648, %v2643
    %v2651 = vadd.s32 %v2618, 4294967256
    %v2652 = vlaneseq
    %v2653 = vshrl.u32 %v2652, 7
    %v2654 = vsub.s32 %v2651, %v2653
    %v2655 = vrot.slane %v2590, %v2654
    %vm2656 = vcmask 392512
    %v2657 = vsel %vm2656, %v2655, %v2650
    %v2658 = vadd.s32 %v2618, 4294967248
    %v2659 = vlaneseq
    %v2660 = vshrl.u32 %v2659, 7
    %v2661 = vsub.s32 %v2658, %v2660
    %v2662 = vrot.slane %v2591, %v2661
    %vm2663 = vcmask 458112
    %v2664 = vsel %vm2663, %v2662, %v2657
    %v2665 = vadd.s32 %v2618, 4294967240
    %v2666 = vlaneseq
    %v2667 = vshrl.u32 %v2666, 7
    %v2668 = vsub.s32 %v2665, %v2667
    %v2669 = vrot.slane %v2592, %v2668
    %vm2670 = vcmask 523712
    %v2671 = vsel %vm2670, %v2669, %v2664
    %v2672 = vadd.s32 %v2618, 4294967232
    %v2673 = vlaneseq
    %v2674 = vshrl.u32 %v2673, 7
    %v2675 = vsub.s32 %v2672, %v2674
    %v2676 = vrot.slane %v2593, %v2675
    %vm2677 = vcmask 589312
    %v2678 = vsel %vm2677, %v2676, %v2671
    %v2679 = vadd.s32 %v2618, 4294967224
    %v2680 = vlaneseq
    %v2681 = vshrl.u32 %v2680, 7
    %v2682 = vsub.s32 %v2679, %v2681
    %v2683 = vrot.slane %v2594, %v2682
    %vm2684 = vcmask 654912
    %v2685 = vsel %vm2684, %v2683, %v2678
    %v2686 = vadd.s32 %v2618, 4294967216
    %v2687 = vlaneseq
    %v2688 = vshrl.u32 %v2687, 7
    %v2689 = vsub.s32 %v2686, %v2688
    %v2690 = vrot.slane %v2595, %v2689
    %vm2691 = vcmask 720512
    %v2692 = vsel %vm2691, %v2690, %v2685
    %v2693 = vadd.s32 %v2618, 4294967208
    %v2694 = vlaneseq
    %v2695 = vshrl.u32 %v2694, 7
    %v2696 = vsub.s32 %v2693, %v2695
    %v2697 = vrot.slane %v2596, %v2696
    %vm2698 = vcmask 786112
    %v2699 = vsel %vm2698, %v2697, %v2692
    %v2700 = vadd.s32 %v2618, 4294967200
    %v2701 = vlaneseq
    %v2702 = vshrl.u32 %v2701, 7
    %v2703 = vsub.s32 %v2700, %v2702
    %v2704 = vrot.slane %v2597, %v2703
    %vm2705 = vcmask 851712
    %v2706 = vsel %vm2705, %v2704, %v2699
    %v2707 = vadd.s32 %v2618, 4294967192
    %v2708 = vlaneseq
    %v2709 = vshrl.u32 %v2708, 7
    %v2710 = vsub.s32 %v2707, %v2709
    %v2711 = vrot.slane %v2598, %v2710
    %vm2712 = vcmask 917312
    %v2713 = vsel %vm2712, %v2711, %v2706
    %v2714 = vadd.s32 %v2618, 4294967184
    %v2715 = vlaneseq
    %v2716 = vshrl.u32 %v2715, 7
    %v2717 = vsub.s32 %v2714, %v2716
    %v2718 = vrot.slane %v2599, %v2717
    %vm2719 = vcmask 982912
    %v2720 = vsel %vm2719, %v2718, %v2713
    %v2721 = vadd.s32 %v2618, 4294967176
    %v2722 = vlaneseq
    %v2723 = vshrl.u32 %v2722, 7
    %v2724 = vsub.s32 %v2721, %v2723
    %v2725 = vrot.slane %v2600, %v2724
    %vm2726 = vcmask 1048512
    %v2727 = vsel %vm2726, %v2725, %v2720
    %2729 = vst [vmem:[#allocation3] sm:$0x1] %v2727
    // Predicated region
    $region22: #{tpu_custom_call.1} parent=1 // pred_check
      _
    $region23: #{tpu_custom_call.1} parent=1 // pred_check_branch
      %2731 = sbr.rel (0) target = $region25
    $region24: #{tpu_custom_call.1} parent=1 // pred_region
      %s2733 = ssub.s32 16, 16
      %2734 = vsyncadd [#allocation4], %s2733
      %s2736 = sshll.u32 [#allocation3], 4
      %s2737 = int_to_ptr.vmem [resolvable:$true] %s2736
      %2739 = dma.vmem_to_hbm [thread:$0]  %s2737, 16, %s5, [#allocation4]
    $region25: #{tpu_custom_call.1} parent=1 // pred_fallthru
      _
    // Predicated region
    $region26: #{tpu_custom_call.1} parent=1 // pred_check
      _
    $region27: #{tpu_custom_call.1} parent=1 // pred_check_branch
      %2741 = sbr.rel (0) target = $region29
    $region28: #{tpu_custom_call.1} parent=1 // pred_region
      %2742 = dma.done [#allocation4], 16
    $region29: #{tpu_custom_call.1} parent=1 // pred_fallthru
      _
    %2743 = vsyncpa [#allocation4], 1

</llo_original>
